<compile_context>
chip_gen: v5e
topology: v5e:2x2
jax: 0.10.0
libtpu: 0.0.40
codegen_flags: <defaults>
</compile_context>

<pallas_src>
import functools

import jax
import jax.numpy as jnp
from jax.experimental import pallas as pl
from jax.experimental.pallas import tpu as pltpu


def _align_kernel(low_ref, high_ref, wl_ref, wh_ref, wf_ref, out_ref,
                  samp_ref, hfup_ref, highbf_ref, *, H, W, IH, IW, TILE):
    """Refs per grid step (n = batch, t = spatial tile):

      low_ref  : (1, Cin, HW)     low (high-res) feature, spatial-last
      high_ref : (1, Cin, IHW)    original high-level (low-res) feature
      wl_ref   : (Cout, Cin)      down_l 1x1 conv weight
      wh_ref   : (Cout, Cin)      down_h 1x1 conv weight
      wf_ref   : (2, 9*2*Cout)    flow_make 3x3 conv weight, folded tap-major
      out_ref  : (1, Cin, TILE)   warped output tile
    Scratch (persists across grid steps, recomputed when t == 0):
      samp_ref  : (2, HW)         un-normalized grid_sample coords (ix; iy)
      hfup_ref  : (Cout, HW)      upsampled down_h(high) feature (f32)
      highbf_ref: (Cin, IHW)      bf16 copy of the high feature (MXU operand)
    """
    f32, bf16 = jnp.float32, jnp.bfloat16
    HW, IHW = H * W, IH * IW
    t = pl.program_id(1)
    lane_aligned = (TILE % 128 == 0)

    def col_of(i):
        c = i * TILE
        return pl.multiple_of(c, 128) if lane_aligned else c

    # Per-source-axis pixel indices (tiny; shared by upsample + warp tents).
    # Separable construction means no flattened-index decode per tile.
    qy = jax.lax.broadcasted_iota(jnp.int32, (IH, 1), 0).astype(f32)   # (IH, 1)
    qx = jax.lax.broadcasted_iota(jnp.int32, (IW, 1), 0).astype(f32)   # (IW, 1)

    # --------------------- per-image stage (tile 0 only) ---------------------
    @pl.when(t == 0)
    def _():
        low = low_ref[0].astype(f32)                       # (Cin, HW)
        high = high_ref[0].astype(f32)                     # (Cin, IHW)
        highbf_ref[...] = high_ref[0].astype(bf16)         # hoisted MXU operand

        # 1x1 convolutions: channel contraction, spatial stays lane-dense.
        low_d = jnp.dot(wl_ref[...].astype(f32), low,
                        preferred_element_type=f32)        # (Cout, HW)
        hf_d = jnp.dot(wh_ref[...].astype(f32), high,
                       preferred_element_type=f32)         # (Cout, IHW)
        hf_d_bf = hf_d.astype(bf16)

        # Output-pixel (row, col); f32 decode is exact for HW < 2**24 (asserted
        # in the wrapper).  Only runs once per image.
        p = jax.lax.broadcasted_iota(jnp.int32, (1, HW), 1).astype(f32)
        pi = jnp.floor(p / W)
        pj = p - pi * W

        # Bilinear upsample hf_d -> (H, W), align_corners=False, in TILE-wide
        # chunks.  Separable tent: ky (IH,TILE) * kx (IW,TILE) -> 1 mul/elem.
        @pl.loop(0, HW // TILE)
        def _(c):
            col = col_of(c)
            pc = (col + jax.lax.broadcasted_iota(jnp.int32, (1, TILE), 1)
                  ).astype(f32)
            ci = jnp.floor(pc / W)
            cj = pc - ci * W
            sy = jnp.clip((ci + 0.5) * (IH / H) - 0.5, 0.0, IH - 1.0)
            sx = jnp.clip((cj + 0.5) * (IW / W) - 0.5, 0.0, IW - 1.0)
            ky = jnp.maximum(0.0, 1.0 - jnp.abs(sy - qy))          # (IH, TILE)
            kx = jnp.maximum(0.0, 1.0 - jnp.abs(sx - qx))          # (IW, TILE)
            k_blk = (ky[:, None, :] * kx[None, :, :]
                     ).reshape(IHW, TILE).astype(bf16)             # (IHW, TILE)
            hfup_ref[:, pl.ds(col, TILE)] = jnp.dot(
                hf_d_bf, k_blk, preferred_element_type=f32)        # (Cout, TILE)

        # 3x3 flow conv (padding=1) on cat([hf_up, low_d]), folded into ONE
        # matmul: stage the 9 shifted/masked taps along K (K = 9*2*Cout).
        cat = jnp.concatenate([hfup_ref[...], low_d], axis=0)      # (2*Cout, HW)
        mask_xm = (pj >= 1.0).astype(f32)      # neighbor at ox = -1 valid
        mask_xp = (pj <= W - 2.0).astype(f32)  # neighbor at ox = +1 valid
        mask_ym = (pi >= 1.0).astype(f32)      # neighbor at oy = -1 valid
        mask_yp = (pi <= H - 2.0).astype(f32)  # neighbor at oy = +1 valid

        def shift_cols(x, d):
            # shifted[:, p] = x[:, (p + d) mod HW]; invalid positions get masked.
            if d == 0:
                return x
            if HW % 128 == 0:
                return pltpu.roll(x, shift=(-d) % HW, axis=1)
            s = d % HW
            return jnp.concatenate([x[:, s:], x[:, :s]], axis=1)

        taps = []
        for oy in (-1, 0, 1):
            for ox in (-1, 0, 1):
                sh = shift_cols(cat, oy * W + ox)
                if ox == -1:
                    sh = sh * mask_xm
                elif ox == 1:
                    sh = sh * mask_xp
                if oy == -1:
                    sh = sh * mask_ym
                elif oy == 1:
                    sh = sh * mask_yp
                taps.append(sh)
        staged = jnp.concatenate(taps, axis=0)                     # (9*2*Cout, HW)
        flow = jnp.dot(wf_ref[...].astype(f32), staged,
                       preferred_element_type=f32)                 # (2, HW)

        # flow_warp sample coordinates (grid_sample, align_corners=True,
        # padding_mode='zeros'), stored once for all tiles of this image.
        fx = flow[0:1, :]                                # x offset (channel 0)
        fy = flow[1:2, :]                                # y offset (channel 1)
        gx = -1.0 + 2.0 * pj / max(W - 1, 1)             # base grid x in [-1,1]
        gy = -1.0 + 2.0 * pi / max(H - 1, 1)             # base grid y in [-1,1]
        ix = (gx + fx / W + 1.0) * (0.5 * (IW - 1))      # source x (pixels)
        iy = (gy + fy / H + 1.0) * (0.5 * (IH - 1))      # source y (pixels)
        samp_ref[...] = jnp.concatenate([ix, iy], axis=0)          # (2, HW)

    # ------------------------- per-tile warp stage ----------------------------
    # Separable bilinear sampling matrix for this tile; tent weights vanish
    # outside the support, reproducing padding_mode='zeros' exactly.
    col = col_of(t)
    ixt = samp_ref[0:1, pl.ds(col, TILE)]                 # (1, TILE)
    iyt = samp_ref[1:2, pl.ds(col, TILE)]
    wx = jnp.maximum(0.0, 1.0 - jnp.abs(ixt - qx))        # (IW, TILE)
    wy = jnp.maximum(0.0, 1.0 - jnp.abs(iyt - qy))        # (IH, TILE)
    s_blk = (wy[:, None, :] * wx[None, :, :]
             ).reshape(IHW, TILE).astype(jnp.bfloat16)    # (IHW, TILE)
    out_ref[0] = jnp.dot(highbf_ref[...], s_blk,
                         preferred_element_type=f32).astype(out_ref.dtype)


def _tpu_vmem_capacity_bytes():
    """Generation-aware per-core VMEM capacity (conservative defaults)."""
    try:
        kind = jax.devices()[0].device_kind.lower()
    except Exception:
        kind = ""
    if "v7" in kind:
        return 64 * 1024 * 1024          # 64 MiB per TensorCore on v7x
    if "v2" in kind or "v3" in kind:
        return 16 * 1024 * 1024
    return 128 * 1024 * 1024             # v4 / v5e / v5p / v6e


def _pick_spatial_tile(HW, IHW, Cin, Cout, IH, IW, elt_bytes, vmem_cap):
    """Largest lane-aligned tile of the flattened output spatial axis whose
    accounted VMEM footprint (tent matrix + factors + resident blocks + scratch)
    fits in ~60% of this generation's VMEM.  TILE may equal HW."""
    if HW % 128 != 0:
        return HW            # must use the full extent (BlockSpec constraint)

    fixed = (2 * Cin * HW * elt_bytes          # low block (double-buffered)
             + 2 * Cin * IHW * elt_bytes       # high block (double-buffered)
             + 2 * HW * 4                      # samp scratch
             + Cout * HW * 4                   # hf_up scratch
             + Cin * IHW * 2                   # bf16 high scratch
             + (9 + 2) * (2 * Cout) * HW * 4)  # staged flow-conv operand + cat
    budget = int(vmem_cap * 0.6)

    def tile_cost(tile):
        return (IHW * tile * 2                 # bf16 tent matrix (s_blk/k_blk)
                + (IH + IW) * tile * 4         # separable f32 factors
                + 2 * Cin * tile * elt_bytes   # out block (double-buffered)
                + Cin * tile * 4)              # f32 matmul accumulator

    best = 128
    for tile in range(128, HW + 1, 128):
        if HW % tile == 0 and fixed + tile_cost(tile) <= budget:
            best = max(best, tile)
    return best


def align_module_forward(low_nchw, high_nchw, w_down_l, w_down_h, w_flow):
    """low_nchw: (N, Cin, H, W), high_nchw: (N, Cin, IH, IW) (PyTorch NCHW).

    w_down_l / w_down_h: (Cout, Cin, 1, 1); w_flow: (2, 2*Cout, 3, 3).
    Returns (N, Cin, H, W), matching AlignModule.forward.
    """
    N, Cin, H, W = low_nchw.shape
    _, _, IH, IW = high_nchw.shape
    Cout = w_down_l.shape[0]
    HW, IHW = H * W, IH * IW
    assert HW < (1 << 24) and IHW < (1 << 24), (
        "float32 flat-index decode is exact only below 2**24 pixels")

    elt = jnp.dtype(low_nchw.dtype).itemsize
    vmem_cap = _tpu_vmem_capacity_bytes()
    TILE = _pick_spatial_tile(HW, IHW, Cin, Cout, IH, IW, elt, vmem_cap)
    n_tiles = HW // TILE

    # Glue: only free reshapes — spatial stays last (lane-dense) end to end.
    low_flat = low_nchw.reshape(N, Cin, HW)
    high_flat = high_nchw.reshape(N, Cin, IHW)
    wl = w_down_l[:, :, 0, 0]                                    # (Cout, Cin)
    wh = w_down_h[:, :, 0, 0]                                    # (Cout, Cin)
    # Folded flow-conv weight: (2, 9*2*Cout), K index = (ky*3+kx)*2*Cout + c.
    wf_fold = jnp.transpose(w_flow, (2, 3, 1, 0)).reshape(9 * 2 * Cout, 2).T

    kernel = functools.partial(_align_kernel, H=H, W=W, IH=IH, IW=IW, TILE=TILE)

    # The low/high blocks are resident for a whole image (block index constant
    # in t); single-buffer them only when they are big enough to matter (saves
    # VMEM on v7x at the cost of one exposed DMA per image).
    single_buf = (Cin * (HW + IHW) * elt) > (4 << 20)

    def resident_spec(shape, imap):
        if single_buf:
            return pl.BlockSpec(shape, imap, pipeline_mode=pl.Buffered(1))
        return pl.BlockSpec(shape, imap)

    flops = 2 * N * (Cout * Cin * HW            # down_l
                     + Cout * Cin * IHW         # down_h
                     + Cout * IHW * HW          # bilinear upsample matmuls
                     + 2 * (9 * 2 * Cout) * HW  # folded 3x3 flow conv
                     + Cin * IHW * HW)          # grid_sample matmuls
    bytes_accessed = (elt * N * (2 * Cin * HW + Cin * IHW)   # low + out + high
                      + 4 * (2 * Cout * Cin + 2 * 9 * 2 * Cout))

    # NOTE: for N == 1 on v7x a tile-level core split (leading core axis of
    # size 2, stage 0 duplicated per core) would recover the idle TensorCore.
    out_flat = pl.pallas_call(
        kernel,
        out_shape=jax.ShapeDtypeStruct((N, Cin, HW), low_nchw.dtype),
        grid_spec=pltpu.PrefetchScalarGridSpec(
            num_scalar_prefetch=0,
            grid=(N, n_tiles),
            in_specs=[
                resident_spec((1, Cin, HW), lambda n, t: (n, 0, 0)),
                resident_spec((1, Cin, IHW), lambda n, t: (n, 0, 0)),
                pl.BlockSpec((Cout, Cin), lambda n, t: (0, 0)),
                pl.BlockSpec((Cout, Cin), lambda n, t: (0, 0)),
                pl.BlockSpec((2, 9 * 2 * Cout), lambda n, t: (0, 0)),
            ],
            out_specs=pl.BlockSpec((1, Cin, TILE), lambda n, t: (n, 0, t)),
            scratch_shapes=[
                pltpu.VMEM((2, HW), jnp.float32),       # sample coords (ix; iy)
                pltpu.VMEM((Cout, HW), jnp.float32),    # upsampled down_h(high)
                pltpu.VMEM((Cin, IHW), jnp.bfloat16),   # bf16 high (MXU operand)
            ],
        ),
        compiler_params=pltpu.CompilerParams(
            dimension_semantics=("parallel", "arbitrary"),
            vmem_limit_bytes=min(int(vmem_cap * 3 // 4), 112 * 1024 * 1024),
        ),
        cost_estimate=pl.CostEstimate(
            flops=flops, transcendentals=0, bytes_accessed=bytes_accessed),
    )(low_flat, high_flat, wl, wh, wf_fold)

    return out_flat.reshape(N, Cin, H, W)


if __name__ == "__main__":
    key = jax.random.PRNGKey(0)
    k1, k2, k3, k4, k5 = jax.random.split(key, 5)

    N, Cin, Cout = 2, 4, 8          # inplane=4, outplane=8
    H = W = 16                      # low_feature spatial size
    IH = IW = 8                     # h_feature spatial size

    low_feature = jax.random.normal(k1, (N, Cin, H, W), jnp.float32)
    h_feature = jax.random.normal(k2, (N, Cin, IH, IW), jnp.float32)

    # deterministic synthetic parameters (same shapes as the nn.Module)
    w_down_h = jax.random.normal(k3, (Cout, Cin, 1, 1), jnp.float32) * 0.2
    w_down_l = jax.random.normal(k4, (Cout, Cin, 1, 1), jnp.float32) * 0.2
    w_flow = jax.random.normal(k5, (2, 2 * Cout, 3, 3), jnp.float32) * 0.1

    out = align_module_forward(low_feature, h_feature, w_down_l, w_down_h, w_flow)
    out = jax.block_until_ready(out)

    assert out.shape == (N, Cin, H, W), out.shape
    assert bool(jnp.all(jnp.isfinite(out)))
    print("KERNEL_OK")
</pallas_src>

<mosaic_0001>
module attributes {stable_mosaic.version = 11 : i64} {
  func.func @_align_kernel(%arg0: i32, %arg1: i32, %arg2: memref<1x4x256xf32, #tpu.memory_space<vmem>>, %arg3: memref<1x4x64xf32, #tpu.memory_space<vmem>>, %arg4: memref<8x4xf32, #tpu.memory_space<vmem>>, %arg5: memref<8x4xf32, #tpu.memory_space<vmem>>, %arg6: memref<2x144xf32, #tpu.memory_space<vmem>>, %arg7: memref<1x4x256xf32, #tpu.memory_space<vmem>>, %arg8: memref<2x256xf32, #tpu.memory_space<vmem>>, %arg9: memref<8x256xf32, #tpu.memory_space<vmem>>, %arg10: memref<4x64xbf16, #tpu.memory_space<vmem>>) attributes {dimension_semantics = [#tpu.dimension_semantics<parallel>, #tpu.dimension_semantics<arbitrary>], iteration_bounds = array<i64: 2, 1>, scalar_prefetch = 0 : i64, scratch_operands = 3 : i64, tpu.core_type = #tpu.core_type<tc>, window_params = [{transform_indices = @transform_0, window_bounds = array<i64: 1, 4, 256>}, {transform_indices = @transform_1, window_bounds = array<i64: 1, 4, 64>}, {pipeline_mode = #tpu.pipeline_mode<synchronous>, transform_indices = @transform_2, window_bounds = array<i64: 8, 4>}, {pipeline_mode = #tpu.pipeline_mode<synchronous>, transform_indices = @transform_3, window_bounds = array<i64: 8, 4>}, {pipeline_mode = #tpu.pipeline_mode<synchronous>, transform_indices = @transform_4, window_bounds = array<i64: 2, 144>}, {transform_indices = @transform_5, window_bounds = array<i64: 1, 4, 256>}]} {
    %0 = tpu.iota {dimensions = array<i32: 0>} : vector<8x1xi32>
    %1 = arith.sitofp %0 : vector<8x1xi32> to vector<8x1xf32>
    %2 = tpu.iota {dimensions = array<i32: 0>} : vector<8x1xi32>
    %3 = arith.sitofp %2 : vector<8x1xi32> to vector<8x1xf32>
    %c0_i32 = arith.constant 0 : i32
    %4 = arith.cmpi eq, %arg1, %c0_i32 : i32
    %5 = arith.extui %4 : i1 to i32
    %c0_i32_0 = arith.constant 0 : i32
    %6 = arith.cmpi ne, %5, %c0_i32_0 : i32
    scf.if %6 {
      %c0_10 = arith.constant 0 : index
      %c0_11 = arith.constant 0 : index
      %c0_12 = arith.constant 0 : index
      %41 = vector.load %arg2[%c0_10, %c0_11, %c0_12] : memref<1x4x256xf32, #tpu.memory_space<vmem>>, vector<1x4x256xf32>
      %42 = vector.shape_cast %41 : vector<1x4x256xf32> to vector<4x256xf32>
      %c0_13 = arith.constant 0 : index
      %c0_14 = arith.constant 0 : index
      %c0_15 = arith.constant 0 : index
      %43 = vector.load %arg3[%c0_13, %c0_14, %c0_15] : memref<1x4x64xf32, #tpu.memory_space<vmem>>, vector<1x4x64xf32>
      %44 = vector.shape_cast %43 : vector<1x4x64xf32> to vector<4x64xf32>
      %c0_16 = arith.constant 0 : index
      %c0_17 = arith.constant 0 : index
      %c0_18 = arith.constant 0 : index
      %45 = vector.load %arg3[%c0_16, %c0_17, %c0_18] : memref<1x4x64xf32, #tpu.memory_space<vmem>>, vector<1x4x64xf32>
      %46 = vector.shape_cast %45 : vector<1x4x64xf32> to vector<4x64xf32>
      %47 = arith.truncf %46 : vector<4x64xf32> to vector<4x64xbf16>
      %c0_19 = arith.constant 0 : index
      %c0_20 = arith.constant 0 : index
      %48 = vector.load %arg10[%c0_19, %c0_20] : memref<4x64xbf16, #tpu.memory_space<vmem>>, vector<4x64xbf16>
      tpu.vector_store %arg10[%c0_19, %c0_20], %47 {strides = array<i32>} : memref<4x64xbf16, #tpu.memory_space<vmem>>, vector<4x64xbf16>,
      %c0_21 = arith.constant 0 : index
      %c0_22 = arith.constant 0 : index
      %49 = vector.load %arg4[%c0_21, %c0_22] : memref<8x4xf32, #tpu.memory_space<vmem>>, vector<8x4xf32>
      %cst_23 = arith.constant dense<0.000000e+00> : vector<8x256xf32>
      %50 = tpu.matmul %49, %42, %cst_23 {dimension_numbers = #tpu.dot_dimension_numbers<[1], [0], [0], [1], [0, 0, 1, 1], [], []>} : vector<8x4xf32>, vector<4x256xf32>, vector<8x256xf32> -> vector<8x256xf32>
      %c0_24 = arith.constant 0 : index
      %c0_25 = arith.constant 0 : index
      %51 = vector.load %arg5[%c0_24, %c0_25] : memref<8x4xf32, #tpu.memory_space<vmem>>, vector<8x4xf32>
      %cst_26 = arith.constant dense<0.000000e+00> : vector<8x64xf32>
      %52 = tpu.matmul %51, %44, %cst_26 {dimension_numbers = #tpu.dot_dimension_numbers<[1], [0], [0], [1], [0, 0, 1, 1], [], []>} : vector<8x4xf32>, vector<4x64xf32>, vector<8x64xf32> -> vector<8x64xf32>
      %53 = arith.truncf %52 : vector<8x64xf32> to vector<8x64xbf16>
      %54 = tpu.iota {dimensions = array<i32: 1>} : vector<1x256xi32>
      %55 = arith.sitofp %54 : vector<1x256xi32> to vector<1x256xf32>
      %cst_27 = arith.constant 1.600000e+01 : f32
      %56 = vector.broadcast %cst_27 : f32 to vector<1x256xf32>
      %57 = arith.divf %55, %56 : vector<1x256xf32>
      %58 = math.floor %57 : vector<1x256xf32>
      %cst_28 = arith.constant 1.600000e+01 : f32
      %59 = vector.broadcast %cst_28 : f32 to vector<1x256xf32>
      %60 = arith.mulf %58, %59 : vector<1x256xf32>
      %61 = arith.subf %55, %60 : vector<1x256xf32>
      %c0_i32_29 = arith.constant 0 : i32
      %c1_i32 = arith.constant 1 : i32
      %62 = arith.muli %c0_i32_29, %c1_i32 : i32
      %c0_i32_30 = arith.constant 0 : i32
      %63 = arith.addi %c0_i32_30, %62 : i32
      %c256_i32_31 = arith.constant 256 : i32
      %64 = arith.muli %63, %c256_i32_31 : i32
      %65 = tpu.assume_multiple %64, 128 : i32
      %66 = tpu.iota {dimensions = array<i32: 1>} : vector<1x256xi32>
      %67 = vector.broadcast %65 : i32 to vector<1x256xi32>
      %68 = arith.addi %67, %66 : vector<1x256xi32>
      %69 = arith.sitofp %68 : vector<1x256xi32> to vector<1x256xf32>
      %cst_32 = arith.constant 1.600000e+01 : f32
      %70 = vector.broadcast %cst_32 : f32 to vector<1x256xf32>
      %71 = arith.divf %69, %70 : vector<1x256xf32>
      %72 = math.floor %71 : vector<1x256xf32>
      %cst_33 = arith.constant 1.600000e+01 : f32
      %73 = vector.broadcast %cst_33 : f32 to vector<1x256xf32>
      %74 = arith.mulf %72, %73 : vector<1x256xf32>
      %75 = arith.subf %69, %74 : vector<1x256xf32>
      %cst_34 = arith.constant 5.000000e-01 : f32
      %76 = vector.broadcast %cst_34 : f32 to vector<1x256xf32>
      %77 = arith.addf %72, %76 : vector<1x256xf32>
      %cst_35 = arith.constant 5.000000e-01 : f32
      %78 = vector.broadcast %cst_35 : f32 to vector<1x256xf32>
      %79 = arith.mulf %77, %78 : vector<1x256xf32>
      %cst_36 = arith.constant 5.000000e-01 : f32
      %80 = vector.broadcast %cst_36 : f32 to vector<1x256xf32>
      %81 = arith.subf %79, %80 : vector<1x256xf32>
      %cst_37 = arith.constant 0.000000e+00 : f32
      %cst_38 = arith.constant 7.000000e+00 : f32
      %82 = vector.broadcast %cst_37 : f32 to vector<1x256xf32>
      %83 = arith.maximumf %82, %81 : vector<1x256xf32>
      %84 = vector.broadcast %cst_38 : f32 to vector<1x256xf32>
      %85 = arith.minimumf %84, %83 : vector<1x256xf32>
      %cst_39 = arith.constant 5.000000e-01 : f32
      %86 = vector.broadcast %cst_39 : f32 to vector<1x256xf32>
      %87 = arith.addf %75, %86 : vector<1x256xf32>
      %cst_40 = arith.constant 5.000000e-01 : f32
      %88 = vector.broadcast %cst_40 : f32 to vector<1x256xf32>
      %89 = arith.mulf %87, %88 : vector<1x256xf32>
      %cst_41 = arith.constant 5.000000e-01 : f32
      %90 = vector.broadcast %cst_41 : f32 to vector<1x256xf32>
      %91 = arith.subf %89, %90 : vector<1x256xf32>
      %cst_42 = arith.constant 0.000000e+00 : f32
      %cst_43 = arith.constant 7.000000e+00 : f32
      %92 = vector.broadcast %cst_42 : f32 to vector<1x256xf32>
      %93 = arith.maximumf %92, %91 : vector<1x256xf32>
      %94 = vector.broadcast %cst_43 : f32 to vector<1x256xf32>
      %95 = arith.minimumf %94, %93 : vector<1x256xf32>
      %96 = vector.broadcast %85 : vector<1x256xf32> to vector<8x256xf32>
      %97 = vector.broadcast %1 : vector<8x1xf32> to vector<8x256xf32>
      %98 = arith.subf %96, %97 : vector<8x256xf32>
      %99 = math.absf %98 : vector<8x256xf32>
      %cst_44 = arith.constant 1.000000e+00 : f32
      %100 = vector.broadcast %cst_44 : f32 to vector<8x256xf32>
      %101 = arith.subf %100, %99 : vector<8x256xf32>
      %cst_45 = arith.constant 0.000000e+00 : f32
      %102 = vector.broadcast %cst_45 : f32 to vector<8x256xf32>
      %103 = arith.maximumf %102, %101 : vector<8x256xf32>
      %104 = vector.broadcast %95 : vector<1x256xf32> to vector<8x256xf32>
      %105 = vector.broadcast %3 : vector<8x1xf32> to vector<8x256xf32>
      %106 = arith.subf %104, %105 : vector<8x256xf32>
      %107 = math.absf %106 : vector<8x256xf32>
      %cst_46 = arith.constant 1.000000e+00 : f32
      %108 = vector.broadcast %cst_46 : f32 to vector<8x256xf32>
      %109 = arith.subf %108, %107 : vector<8x256xf32>
      %cst_47 = arith.constant 0.000000e+00 : f32
      %110 = vector.broadcast %cst_47 : f32 to vector<8x256xf32>
      %111 = arith.maximumf %110, %109 : vector<8x256xf32>
      %112 = vector.shape_cast %103 : vector<8x256xf32> to vector<8x1x256xf32>
      %113 = vector.shape_cast %111 : vector<8x256xf32> to vector<1x8x256xf32>
      %114 = vector.broadcast %112 : vector<8x1x256xf32> to vector<8x8x256xf32>
      %115 = vector.broadcast %113 : vector<1x8x256xf32> to vector<8x8x256xf32>
      %116 = arith.mulf %114, %115 : vector<8x8x256xf32>
      %117 = vector.shape_cast %116 : vector<8x8x256xf32> to vector<64x256xf32>
      %118 = arith.truncf %117 : vector<64x256xf32> to vector<64x256xbf16>
      %cst_48 = arith.constant dense<0.000000e+00> : vector<8x256xf32>
      %119 = tpu.matmul %53, %118, %cst_48 {dimension_numbers = #tpu.dot_dimension_numbers<[1], [0], [0], [1], [0, 0, 1, 1], [], []>} : vector<8x64xbf16>, vector<64x256xbf16>, vector<8x256xf32> -> vector<8x256xf32>
      %c0_49 = arith.constant 0 : index
      %120 = arith.index_cast %65 : i32 to index
      %121 = vector.load %arg9[%c0_49, %120] : memref<8x256xf32, #tpu.memory_space<vmem>>, vector<8x256xf32>
      tpu.vector_store %arg9[%c0_49, %120], %119 {strides = array<i32>} : memref<8x256xf32, #tpu.memory_space<vmem>>, vector<8x256xf32>,
      %c1_i32_50 = arith.constant 1 : i32
      %c0_51 = arith.constant 0 : index
      %c0_52 = arith.constant 0 : index
      %122 = vector.load %arg9[%c0_51, %c0_52] : memref<8x256xf32, #tpu.memory_space<vmem>>, vector<8x256xf32>
      %123 = tpu.concatenate %122, %50 in 0 : vector<8x256xf32>, vector<8x256xf32> -> vector<16x256xf32>
      %cst_53 = arith.constant 1.000000e+00 : f32
      %124 = vector.broadcast %cst_53 : f32 to vector<1x256xf32>
      %125 = arith.cmpf oge, %61, %124 : vector<1x256xf32>
      %126 = arith.extui %125 : vector<1x256xi1> to vector<1x256xi32>
      %127 = arith.sitofp %126 : vector<1x256xi32> to vector<1x256xf32>
      %cst_54 = arith.constant 1.400000e+01 : f32
      %128 = vector.broadcast %cst_54 : f32 to vector<1x256xf32>
      %129 = arith.cmpf ole, %61, %128 : vector<1x256xf32>
      %130 = arith.extui %129 : vector<1x256xi1> to vector<1x256xi32>
      %131 = arith.sitofp %130 : vector<1x256xi32> to vector<1x256xf32>
      %cst_55 = arith.constant 1.000000e+00 : f32
      %132 = vector.broadcast %cst_55 : f32 to vector<1x256xf32>
      %133 = arith.cmpf oge, %58, %132 : vector<1x256xf32>
      %134 = arith.extui %133 : vector<1x256xi1> to vector<1x256xi32>
      %135 = arith.sitofp %134 : vector<1x256xi32> to vector<1x256xf32>
      %cst_56 = arith.constant 1.400000e+01 : f32
      %136 = vector.broadcast %cst_56 : f32 to vector<1x256xf32>
      %137 = arith.cmpf ole, %58, %136 : vector<1x256xf32>
      %138 = arith.extui %137 : vector<1x256xi1> to vector<1x256xi32>
      %139 = arith.sitofp %138 : vector<1x256xi32> to vector<1x256xf32>
      %c17_i32 = arith.constant 17 : i32
      %140 = tpu.dynamic_rotate %123 by %c17_i32 dim 1 : vector<16x256xf32>, i32 -> vector<16x256xf32>
      %141 = vector.broadcast %127 : vector<1x256xf32> to vector<16x256xf32>
      %142 = arith.mulf %140, %141 : vector<16x256xf32>
      %143 = vector.broadcast %135 : vector<1x256xf32> to vector<16x256xf32>
      %144 = arith.mulf %142, %143 : vector<16x256xf32>
      %c16_i32 = arith.constant 16 : i32
      %145 = tpu.dynamic_rotate %123 by %c16_i32 dim 1 : vector<16x256xf32>, i32 -> vector<16x256xf32>
      %146 = vector.broadcast %135 : vector<1x256xf32> to vector<16x256xf32>
      %147 = arith.mulf %145, %146 : vector<16x256xf32>
      %c15_i32 = arith.constant 15 : i32
      %148 = tpu.dynamic_rotate %123 by %c15_i32 dim 1 : vector<16x256xf32>, i32 -> vector<16x256xf32>
      %149 = vector.broadcast %131 : vector<1x256xf32> to vector<16x256xf32>
      %150 = arith.mulf %148, %149 : vector<16x256xf32>
      %151 = vector.broadcast %135 : vector<1x256xf32> to vector<16x256xf32>
      %152 = arith.mulf %150, %151 : vector<16x256xf32>
      %c1_i32_57 = arith.constant 1 : i32
      %153 = tpu.dynamic_rotate %123 by %c1_i32_57 dim 1 : vector<16x256xf32>, i32 -> vector<16x256xf32>
      %154 = vector.broadcast %127 : vector<1x256xf32> to vector<16x256xf32>
      %155 = arith.mulf %153, %154 : vector<16x256xf32>
      %c255_i32 = arith.constant 255 : i32
      %156 = tpu.dynamic_rotate %123 by %c255_i32 dim 1 : vector<16x256xf32>, i32 -> vector<16x256xf32>
      %157 = vector.broadcast %131 : vector<1x256xf32> to vector<16x256xf32>
      %158 = arith.mulf %156, %157 : vector<16x256xf32>
      %c241_i32 = arith.constant 241 : i32
      %159 = tpu.dynamic_rotate %123 by %c241_i32 dim 1 : vector<16x256xf32>, i32 -> vector<16x256xf32>
      %160 = vector.broadcast %127 : vector<1x256xf32> to vector<16x256xf32>
      %161 = arith.mulf %159, %160 : vector<16x256xf32>
      %162 = vector.broadcast %139 : vector<1x256xf32> to vector<16x256xf32>
      %163 = arith.mulf %161, %162 : vector<16x256xf32>
      %c240_i32 = arith.constant 240 : i32
      %164 = tpu.dynamic_rotate %123 by %c240_i32 dim 1 : vector<16x256xf32>, i32 -> vector<16x256xf32>
      %165 = vector.broadcast %139 : vector<1x256xf32> to vector<16x256xf32>
      %166 = arith.mulf %164, %165 : vector<16x256xf32>
      %c239_i32 = arith.constant 239 : i32
      %167 = tpu.dynamic_rotate %123 by %c239_i32 dim 1 : vector<16x256xf32>, i32 -> vector<16x256xf32>
      %168 = vector.broadcast %131 : vector<1x256xf32> to vector<16x256xf32>
      %169 = arith.mulf %167, %168 : vector<16x256xf32>
      %170 = vector.broadcast %139 : vector<1x256xf32> to vector<16x256xf32>
      %171 = arith.mulf %169, %170 : vector<16x256xf32>
      %172 = tpu.concatenate %144, %147, %152, %155, %123, %158, %163, %166, %171 in 0 : vector<16x256xf32>, vector<16x256xf32>, vector<16x256xf32>, vector<16x256xf32>, vector<16x256xf32>, vector<16x256xf32>, vector<16x256xf32>, vector<16x256xf32>, vector<16x256xf32> -> vector<144x256xf32>
      %c0_58 = arith.constant 0 : index
      %c0_59 = arith.constant 0 : index
      %173 = vector.load %arg6[%c0_58, %c0_59] : memref<2x144xf32, #tpu.memory_space<vmem>>, vector<2x144xf32>
      %cst_60 = arith.constant dense<0.000000e+00> : vector<2x256xf32>
      %174 = tpu.matmul %173, %172, %cst_60 {dimension_numbers = #tpu.dot_dimension_numbers<[1], [0], [0], [1], [0, 0, 1, 1], [], []>} : vector<2x144xf32>, vector<144x256xf32>, vector<2x256xf32> -> vector<2x256xf32>
      %175 = vector.extract_strided_slice %174 {offsets = [0, 0], sizes = [1, 256], strides = [1, 1]} : vector<2x256xf32> to vector<1x256xf32>
      %176 = vector.extract_strided_slice %174 {offsets = [1, 0], sizes = [1, 256], strides = [1, 1]} : vector<2x256xf32> to vector<1x256xf32>
      %cst_61 = arith.constant 2.000000e+00 : f32
      %177 = vector.broadcast %cst_61 : f32 to vector<1x256xf32>
      %178 = arith.mulf %177, %61 : vector<1x256xf32>
      %cst_62 = arith.constant 1.500000e+01 : f32
      %179 = vector.broadcast %cst_62 : f32 to vector<1x256xf32>
      %180 = arith.divf %178, %179 : vector<1x256xf32>
      %cst_63 = arith.constant -1.000000e+00 : f32
      %181 = vector.broadcast %cst_63 : f32 to vector<1x256xf32>
      %182 = arith.addf %181, %180 : vector<1x256xf32>
      %cst_64 = arith.constant 2.000000e+00 : f32
      %183 = vector.broadcast %cst_64 : f32 to vector<1x256xf32>
      %184 = arith.mulf %183, %58 : vector<1x256xf32>
      %cst_65 = arith.constant 1.500000e+01 : f32
      %185 = vector.broadcast %cst_65 : f32 to vector<1x256xf32>
      %186 = arith.divf %184, %185 : vector<1x256xf32>
      %cst_66 = arith.constant -1.000000e+00 : f32
      %187 = vector.broadcast %cst_66 : f32 to vector<1x256xf32>
      %188 = arith.addf %187, %186 : vector<1x256xf32>
      %cst_67 = arith.constant 1.600000e+01 : f32
      %189 = vector.broadcast %cst_67 : f32 to vector<1x256xf32>
      %190 = arith.divf %175, %189 : vector<1x256xf32>
      %191 = arith.addf %182, %190 : vector<1x256xf32>
      %cst_68 = arith.constant 1.000000e+00 : f32
      %192 = vector.broadcast %cst_68 : f32 to vector<1x256xf32>
      %193 = arith.addf %191, %192 : vector<1x256xf32>
      %cst_69 = arith.constant 3.500000e+00 : f32
      %194 = vector.broadcast %cst_69 : f32 to vector<1x256xf32>
      %195 = arith.mulf %193, %194 : vector<1x256xf32>
      %cst_70 = arith.constant 1.600000e+01 : f32
      %196 = vector.broadcast %cst_70 : f32 to vector<1x256xf32>
      %197 = arith.divf %176, %196 : vector<1x256xf32>
      %198 = arith.addf %188, %197 : vector<1x256xf32>
      %cst_71 = arith.constant 1.000000e+00 : f32
      %199 = vector.broadcast %cst_71 : f32 to vector<1x256xf32>
      %200 = arith.addf %198, %199 : vector<1x256xf32>
      %cst_72 = arith.constant 3.500000e+00 : f32
      %201 = vector.broadcast %cst_72 : f32 to vector<1x256xf32>
      %202 = arith.mulf %200, %201 : vector<1x256xf32>
      %203 = tpu.concatenate %195, %202 in 0 : vector<1x256xf32>, vector<1x256xf32> -> vector<2x256xf32>
      %c0_73 = arith.constant 0 : index
      %c0_74 = arith.constant 0 : index
      %204 = vector.load %arg8[%c0_73, %c0_74] : memref<2x256xf32, #tpu.memory_space<vmem>>, vector<2x256xf32>
      tpu.vector_store %arg8[%c0_73, %c0_74], %203 {strides = array<i32>} : memref<2x256xf32, #tpu.memory_space<vmem>>, vector<2x256xf32>,
    } else {
    }
    %c256_i32 = arith.constant 256 : i32
    %7 = arith.muli %arg1, %c256_i32 : i32
    %8 = tpu.assume_multiple %7, 128 : i32
    %c0 = arith.constant 0 : index
    %9 = arith.index_cast %8 : i32 to index
    %10 = vector.load %arg8[%c0, %9] : memref<2x256xf32, #tpu.memory_space<vmem>>, vector<1x256xf32>
    %c1 = arith.constant 1 : index
    %11 = arith.index_cast %8 : i32 to index
    %12 = vector.load %arg8[%c1, %11] : memref<2x256xf32, #tpu.memory_space<vmem>>, vector<1x256xf32>
    %13 = vector.broadcast %10 : vector<1x256xf32> to vector<8x256xf32>
    %14 = vector.broadcast %3 : vector<8x1xf32> to vector<8x256xf32>
    %15 = arith.subf %13, %14 : vector<8x256xf32>
    %16 = math.absf %15 : vector<8x256xf32>
    %cst = arith.constant 1.000000e+00 : f32
    %17 = vector.broadcast %cst : f32 to vector<8x256xf32>
    %18 = arith.subf %17, %16 : vector<8x256xf32>
    %cst_1 = arith.constant 0.000000e+00 : f32
    %19 = vector.broadcast %cst_1 : f32 to vector<8x256xf32>
    %20 = arith.maximumf %19, %18 : vector<8x256xf32>
    %21 = vector.broadcast %12 : vector<1x256xf32> to vector<8x256xf32>
    %22 = vector.broadcast %1 : vector<8x1xf32> to vector<8x256xf32>
    %23 = arith.subf %21, %22 : vector<8x256xf32>
    %24 = math.absf %23 : vector<8x256xf32>
    %cst_2 = arith.constant 1.000000e+00 : f32
    %25 = vector.broadcast %cst_2 : f32 to vector<8x256xf32>
    %26 = arith.subf %25, %24 : vector<8x256xf32>
    %cst_3 = arith.constant 0.000000e+00 : f32
    %27 = vector.broadcast %cst_3 : f32 to vector<8x256xf32>
    %28 = arith.maximumf %27, %26 : vector<8x256xf32>
    %29 = vector.shape_cast %28 : vector<8x256xf32> to vector<8x1x256xf32>
    %30 = vector.shape_cast %20 : vector<8x256xf32> to vector<1x8x256xf32>
    %31 = vector.broadcast %29 : vector<8x1x256xf32> to vector<8x8x256xf32>
    %32 = vector.broadcast %30 : vector<1x8x256xf32> to vector<8x8x256xf32>
    %33 = arith.mulf %31, %32 : vector<8x8x256xf32>
    %34 = vector.shape_cast %33 : vector<8x8x256xf32> to vector<64x256xf32>
    %35 = arith.truncf %34 : vector<64x256xf32> to vector<64x256xbf16>
    %c0_4 = arith.constant 0 : index
    %c0_5 = arith.constant 0 : index
    %36 = vector.load %arg10[%c0_4, %c0_5] : memref<4x64xbf16, #tpu.memory_space<vmem>>, vector<4x64xbf16>
    %cst_6 = arith.constant dense<0.000000e+00> : vector<4x256xf32>
    %37 = tpu.matmul %36, %35, %cst_6 {dimension_numbers = #tpu.dot_dimension_numbers<[1], [0], [0], [1], [0, 0, 1, 1], [], []>} : vector<4x64xbf16>, vector<64x256xbf16>, vector<4x256xf32> -> vector<4x256xf32>
    %c0_7 = arith.constant 0 : index
    %c0_8 = arith.constant 0 : index
    %c0_9 = arith.constant 0 : index
    %38 = vector.load %arg7[%c0_7, %c0_8, %c0_9] : memref<1x4x256xf32, #tpu.memory_space<vmem>>, vector<1x4x256xf32>
    %39 = vector.shape_cast %38 : vector<1x4x256xf32> to vector<4x256xf32>
    %40 = vector.shape_cast %37 : vector<4x256xf32> to vector<1x4x256xf32>
    tpu.vector_store %arg7[%c0_7, %c0_8, %c0_9], %40 {strides = array<i32>} : memref<1x4x256xf32, #tpu.memory_space<vmem>>, vector<1x4x256xf32>,
    return
  }
  func.func @transform_0(%arg0: i32, %arg1: i32) -> (i32, i32, i32) {
    %c0_i32 = arith.constant 0 : i32
    %c0_i32_0 = arith.constant 0 : i32
    %c0_i32_1 = arith.constant 0 : i32
    return %arg0, %c0_i32, %c0_i32_0 : i32, i32, i32
  }
  func.func @transform_1(%arg0: i32, %arg1: i32) -> (i32, i32, i32) {
    %c0_i32 = arith.constant 0 : i32
    %c0_i32_0 = arith.constant 0 : i32
    %c0_i32_1 = arith.constant 0 : i32
    return %arg0, %c0_i32, %c0_i32_0 : i32, i32, i32
  }
  func.func @transform_2(%arg0: i32, %arg1: i32) -> (i32, i32) {
    %c0_i32 = arith.constant 0 : i32
    %c0_i32_0 = arith.constant 0 : i32
    %c0_i32_1 = arith.constant 0 : i32
    return %c0_i32, %c0_i32_0 : i32, i32
  }
  func.func @transform_3(%arg0: i32, %arg1: i32) -> (i32, i32) {
    %c0_i32 = arith.constant 0 : i32
    %c0_i32_0 = arith.constant 0 : i32
    %c0_i32_1 = arith.constant 0 : i32
    return %c0_i32, %c0_i32_0 : i32, i32
  }
  func.func @transform_4(%arg0: i32, %arg1: i32) -> (i32, i32) {
    %c0_i32 = arith.constant 0 : i32
    %c0_i32_0 = arith.constant 0 : i32
    %c0_i32_1 = arith.constant 0 : i32
    return %c0_i32, %c0_i32_0 : i32, i32
  }
  func.func @transform_5(%arg0: i32, %arg1: i32) -> (i32, i32, i32) {
    %c0_i32 = arith.constant 0 : i32
    %c0_i32_0 = arith.constant 0 : i32
    return %arg0, %c0_i32, %arg1 : i32, i32, i32
  }
}

</mosaic_0001>

<llo_original>
// kernel: tpu_custom_call.1
$region0: #{tpu_custom_call.1}
  #allocation0 [shape = 'u32[]', space=smem, size = 0x4, offset = 0x4, fixed_abs, tag = 'smem constant byte address 0x4 - core index']
  #allocation1 [shape = 'u32[72,128]{1,0:T(1,128)}', space=vmem, size = 0x9000, scoped, tag = 'internal scratch']
  #allocation2 [shape = 'f32[2,256]{1,0:T(2,128)}', space=vmem, size = 0x800, scoped, tag = 'scratch operand']
  #allocation3 [shape = 'f32[8,256]{1,0:T(8,128)}', space=vmem, size = 0x2000, scoped, tag = 'scratch operand']
  #allocation4 [shape = 'bf16[4,64]{1,0:T(4,128)(2,1)}', space=vmem, size = 0x400, scoped, tag = 'scratch operand']
  %s0 = inlined_call_operand.vmem [shape: f32[2,4,256], index: 0, kind: input, shape index: {}]
  %s1 = inlined_call_operand.vmem [shape: f32[2,4,64], index: 1, kind: input, shape index: {}]
  %s2 = inlined_call_operand.vmem [shape: f32[8,4], index: 2, kind: input, shape index: {}]
  %s3 = inlined_call_operand.vmem [shape: f32[8,4], index: 3, kind: input, shape index: {}]
  %s4 = inlined_call_operand.hbm [shape: f32[2,144], index: 4, kind: input, shape index: {}]
  %s5 = inlined_call_operand.hbm [shape: f32[2,4,256], index: 5, kind: output, shape index: {}]
  %s6 = sld [smem:[#allocation0]]
  $region61: #{tpu_custom_call.1} parent=0
    _
  %s8 = ssub.s32 1, %s6
  %s9 = scalar_select 0, %s8, %s6
  $region1: #{tpu_custom_call.1} parent=0
    #allocation5 [shape = 'u8[2048]{0}', space=vmem, size = 0x800, scoped, tag = 'input window, operand 4, single buffered']
    #allocation6 [shape = 's32[2]{0}', space=sflag, size = 0x8, scoped, tag = 'scoped memory for tpu_custom_call.1']
    #allocation7 [shape = 's32[2]{0}', space=sflag, size = 0x8, scoped, tag = 'scoped memory for tpu_custom_call.1']
    #allocation8 [shape = 'u8[8192]{0}', space=vmem, size = 0x2000, scoped, tag = 'output window, operand 0']
    %10 = vsyncpa [#allocation6], 0
    %11 = vsyncpa [#allocation7], 0
    %s12 = scalar_lea.sflag [#allocation7], 1
    %13 = vsyncpa %s12, 0
    loop: start=0, step=1, limit=4
    $region2: #{tpu_custom_call.1} parent=1 // loop_pre_header
      _
    $region3: #{tpu_custom_call.1} parent=1 // loop_header
      %s15 = sphi 0, %s19
      %p16 = scmp.ge.s32.totalorder %s15, 4
      %s22 = sphi 0, %s34
      %s23 = sphi 0, %s30
      %s24 = sphi 0, %s22
      %s25 = sphi 0, %s23
      %s26 = sphi 0, %s24
      %s27 = sphi 0, %s25
      %s37 = sphi 0, %s39
      %s40 = sphi 0, %s37
      %s41 = sphi 0, %s40
      %s57 = sphi 0, %s41
      %s63 = sphi 0, %s65
      %s66 = sphi 0, %s63
      %s67 = sphi 0, %s66
      %s83 = sphi 0, %s67
      %s87 = sphi 0, %s87
      %s89 = sphi 0, %s87
      %s90 = sphi 0, %s89
      %s104 = sphi 0, %s90
      %s108 = sphi 0, %s108
      %s110 = sphi 0, %s108
      %s111 = sphi 0, %s110
      %s125 = sphi 0, %s111
      %s129 = sphi 0, %s129
      %s131 = sphi 0, %s129
      %s132 = sphi 0, %s131
      %s146 = sphi 0, %s132
      %s154 = sphi 0, %s156
      %s157 = sphi 0, %s154
      %s158 = sphi 0, %s157
      %s174 = sphi 0, %s158
    $region4: #{tpu_custom_call.1} parent=1 // loop_header_branch
      %18 = sbr.rel (%p16) target = $region8
    $region5: #{tpu_custom_call.1} parent=1 // loop_body
      %s20 = ssub.s32 %s15, 1
      %s21 = ssub.s32 %s15, 2
      %s28 = sadd.s32 1, %s23
      %p29 = scmp.ge.s32.totalorder %s28, 1
      %s30 = scalar_select %p29, 0, %s28
      %s31 = sadd.s32 1, %s22
      %s32 = scalar_select %p29, %s31, %s22
      %p33 = scmp.ge.s32.totalorder %s32, 2
      %s34 = scalar_select %p33, 0, %s32
      %s35 = ssub.s32 %s22, %s34
      %p36 = scmp.eq.s32.totalorder %s35, 0
      %s38 = sadd.s32 %s37, 1
      %s39 = scalar_select %p36, %s37, %s38
      %p42 = pneg %p36
      %p43 = scmp.eq.s32.totalorder %s15, 1
      %p44 = por %p42, %p43
      %p45 = scmp.ne.s32.totalorder %s37, %s40
      %p46 = scmp.eq.s32.totalorder %s15, 0
      %p47 = por %p45, %p46
      %p48 = scmp.ne.s32.totalorder %s37, %s40
      %p49 = scmp.eq.s32.totalorder %s20, 1
      %p50 = por %p48, %p49
      %p51 = scmp.ne.s32.totalorder %s40, %s41
      %p52 = scmp.eq.s32.totalorder %s20, 0
      %p53 = por %p51, %p52
      %p54 = scmp.ne.s32.totalorder %s40, %s41
      %p55 = scmp.eq.s32.totalorder %s21, 1
      %p56 = por %p54, %p55
      %p58 = scmp.ne.s32.totalorder %s41, %s57
      %p59 = scmp.eq.s32.totalorder %s21, 0
      %p60 = por %p58, %p59
      %s61 = ssub.s32 %s22, %s34
      %p62 = scmp.eq.s32.totalorder %s61, 0
      %s64 = sadd.s32 %s63, 1
      %s65 = scalar_select %p62, %s63, %s64
      %p68 = pneg %p62
      %p69 = scmp.eq.s32.totalorder %s15, 1
      %p70 = por %p68, %p69
      %p71 = scmp.ne.s32.totalorder %s63, %s66
      %p72 = scmp.eq.s32.totalorder %s15, 0
      %p73 = por %p71, %p72
      %p74 = scmp.ne.s32.totalorder %s63, %s66
      %p75 = scmp.eq.s32.totalorder %s20, 1
      %p76 = por %p74, %p75
      %p77 = scmp.ne.s32.totalorder %s66, %s67
      %p78 = scmp.eq.s32.totalorder %s20, 0
      %p79 = por %p77, %p78
      %p80 = scmp.ne.s32.totalorder %s66, %s67
      %p81 = scmp.eq.s32.totalorder %s21, 1
      %p82 = por %p80, %p81
      %p84 = scmp.ne.s32.totalorder %s67, %s83
      %p85 = scmp.eq.s32.totalorder %s21, 0
      %p86 = por %p84, %p85
      %s88 = sadd.s32 %s87, 1
      %p91 = scmp.eq.s32.totalorder %s15, 1
      %p92 = scmp.ne.s32.totalorder %s87, %s89
      %p93 = scmp.eq.s32.totalorder %s15, 0
      %p94 = por %p92, %p93
      %p95 = scmp.ne.s32.totalorder %s87, %s89
      %p96 = scmp.eq.s32.totalorder %s20, 1
      %p97 = por %p95, %p96
      %p98 = scmp.ne.s32.totalorder %s89, %s90
      %p99 = scmp.eq.s32.totalorder %s20, 0
      %p100 = por %p98, %p99
      %p101 = scmp.ne.s32.totalorder %s89, %s90
      %p102 = scmp.eq.s32.totalorder %s21, 1
      %p103 = por %p101, %p102
      %p105 = scmp.ne.s32.totalorder %s90, %s104
      %p106 = scmp.eq.s32.totalorder %s21, 0
      %p107 = por %p105, %p106
      %s109 = sadd.s32 %s108, 1
      %p112 = scmp.eq.s32.totalorder %s15, 1
      %p113 = scmp.ne.s32.totalorder %s108, %s110
      %p114 = scmp.eq.s32.totalorder %s15, 0
      %p115 = por %p113, %p114
      %p116 = scmp.ne.s32.totalorder %s108, %s110
      %p117 = scmp.eq.s32.totalorder %s20, 1
      %p118 = por %p116, %p117
      %p119 = scmp.ne.s32.totalorder %s110, %s111
      %p120 = scmp.eq.s32.totalorder %s20, 0
      %p121 = por %p119, %p120
      %p122 = scmp.ne.s32.totalorder %s110, %s111
      %p123 = scmp.eq.s32.totalorder %s21, 1
      %p124 = por %p122, %p123
      %p126 = scmp.ne.s32.totalorder %s111, %s125
      %p127 = scmp.eq.s32.totalorder %s21, 0
      %p128 = por %p126, %p127
      %s130 = sadd.s32 %s129, 1
      %p133 = scmp.eq.s32.totalorder %s15, 1
      %p134 = scmp.ne.s32.totalorder %s129, %s131
      %p135 = scmp.eq.s32.totalorder %s15, 0
      %p136 = por %p134, %p135
      %p137 = scmp.ne.s32.totalorder %s129, %s131
      %p138 = scmp.eq.s32.totalorder %s20, 1
      %p139 = por %p137, %p138
      %p140 = scmp.ne.s32.totalorder %s131, %s132
      %p141 = scmp.eq.s32.totalorder %s20, 0
      %p142 = por %p140, %p141
      %p143 = scmp.ne.s32.totalorder %s131, %s132
      %p144 = scmp.eq.s32.totalorder %s21, 1
      %p145 = por %p143, %p144
      %p147 = scmp.ne.s32.totalorder %s132, %s146
      %p148 = scmp.eq.s32.totalorder %s21, 0
      %p149 = por %p147, %p148
      %s150 = ssub.s32 %s22, %s34
      %s151 = ssub.s32 %s23, %s30
      %s152 = sor.u32 %s150, %s151
      %p153 = scmp.eq.s32.totalorder %s152, 0
      %s155 = sadd.s32 %s154, 1
      %s156 = scalar_select %p153, %s154, %s155
      %p159 = pneg %p153
      %p160 = scmp.eq.s32.totalorder %s15, 1
      %p161 = por %p159, %p160
      %p162 = scmp.ne.s32.totalorder %s154, %s157
      %p163 = scmp.eq.s32.totalorder %s15, 0
      %p164 = por %p162, %p163
      %p165 = scmp.ne.s32.totalorder %s154, %s157
      %p166 = scmp.eq.s32.totalorder %s20, 1
      %p167 = por %p165, %p166
      %p168 = scmp.ne.s32.totalorder %s157, %s158
      %p169 = scmp.eq.s32.totalorder %s20, 0
      %p170 = por %p168, %p169
      %p171 = scmp.ne.s32.totalorder %s157, %s158
      %p172 = scmp.eq.s32.totalorder %s21, 1
      %p173 = por %p171, %p172
      %p175 = scmp.ne.s32.totalorder %s158, %s174
      %p176 = scmp.eq.s32.totalorder %s21, 0
      %p177 = por %p175, %p176
      %p178 = scmp.le.s32.totalorder 1, %s15
      %p179 = scmp.lt.s32.totalorder %s15, 3
      %p180 = pnand %p178, %p179
      %p181 = pneg %p180
      // Predicated region
      $region9: #{tpu_custom_call.1} parent=5 // pred_check
        _
      $region10: #{tpu_custom_call.1} parent=5 // pred_check_branch
        %183 = sbr.rel (%p180) target = $region12
      $region11: #{tpu_custom_call.1} parent=5 // pred_region
        %s184 = ssub.s32 %s15, 1
        // Predicated region
        $region13: #{tpu_custom_call.1} parent=11 // pred_check
          %p185 = pneg %p100
        $region14: #{tpu_custom_call.1} parent=11 // pred_check_branch
          %187 = sbr.rel (%p185) target = $region16
        $region15: #{tpu_custom_call.1} parent=11 // pred_region
          _
        $region16: #{tpu_custom_call.1} parent=11 // pred_fallthru
          _
        // Predicated region
        $region17: #{tpu_custom_call.1} parent=11 // pred_check
          %p188 = pneg %p121
        $region18: #{tpu_custom_call.1} parent=11 // pred_check_branch
          %190 = sbr.rel (%p188) target = $region20
        $region19: #{tpu_custom_call.1} parent=11 // pred_region
          _
        $region20: #{tpu_custom_call.1} parent=11 // pred_fallthru
          _
        // Predicated region
        $region21: #{tpu_custom_call.1} parent=11 // pred_check
          %p191 = pneg %p142
        $region22: #{tpu_custom_call.1} parent=11 // pred_check_branch
          %193 = sbr.rel (%p191) target = $region24
        $region23: #{tpu_custom_call.1} parent=11 // pred_region
          %195 = vsyncadd [#allocation6], 0
          %s197 = sshll.u32 %s4, 4
          %s198 = int_to_ptr.hbm [resolvable:$true] %s197
          %s199 = sshll.u32 [#allocation5], 4
          %s200 = int_to_ptr.vmem [resolvable:$true] %s199
          %202 = dma.hbm_to_vmem [thread:$0]  %s198, 64, %s200, [#allocation6]
        $region24: #{tpu_custom_call.1} parent=11 // pred_fallthru
          _
      $region12: #{tpu_custom_call.1} parent=5 // pred_fallthru
        _
      %p203 = scmp.lt.s32.totalorder %s15, 2
      // Predicated region
      $region25: #{tpu_custom_call.1} parent=5 // pred_check
        %p204 = pneg %p203
      $region26: #{tpu_custom_call.1} parent=5 // pred_check_branch
        %206 = sbr.rel (%p204) target = $region28
      $region27: #{tpu_custom_call.1} parent=5 // pred_region
        // Predicated region
        $region29: #{tpu_custom_call.1} parent=27 // pred_check
          %p207 = pneg %p47
        $region30: #{tpu_custom_call.1} parent=27 // pred_check_branch
          %209 = sbr.rel (%p207) target = $region32
        $region31: #{tpu_custom_call.1} parent=27 // pred_region
          %p210 = scmp.lt.s32.totalorder %s22, 1
          %s211 = scalar_select %p210, %s22, 1
          %s212 = smul.addr %s211, 2
          %s213 = smul.addr %s212, 4
          %s214 = scalar_lea.vmem %s0, %s213
        $region32: #{tpu_custom_call.1} parent=27 // pred_fallthru
          _
        // Predicated region
        $region33: #{tpu_custom_call.1} parent=27 // pred_check
          %p215 = pneg %p73
        $region34: #{tpu_custom_call.1} parent=27 // pred_check_branch
          %217 = sbr.rel (%p215) target = $region36
        $region35: #{tpu_custom_call.1} parent=27 // pred_region
          %p218 = scmp.lt.s32.totalorder %s22, 1
          %s219 = scalar_select %p218, %s22, 1
          %s220 = smul.addr %s219, 4
          %s221 = scalar_lea.vmem %s1, %s220
        $region36: #{tpu_custom_call.1} parent=27 // pred_fallthru
          _
      $region28: #{tpu_custom_call.1} parent=5 // pred_fallthru
        _
      %p222 = scmp.le.s32.totalorder 1, %s15
      %p223 = scmp.lt.s32.totalorder %s15, 3
      %p224 = pnand %p222, %p223
      %p225 = pneg %p224
      // Predicated region
      $region37: #{tpu_custom_call.1} parent=5 // pred_check
        _
      $region38: #{tpu_custom_call.1} parent=5 // pred_check_branch
        %227 = sbr.rel (%p224) target = $region40
      $region39: #{tpu_custom_call.1} parent=5 // pred_region
        %s228 = ssub.s32 %s15, 1
        // Predicated region
        $region41: #{tpu_custom_call.1} parent=39 // pred_check
          %p229 = pneg %p142
        $region42: #{tpu_custom_call.1} parent=39 // pred_check_branch
          %231 = sbr.rel (%p229) target = $region44
        $region43: #{tpu_custom_call.1} parent=39 // pred_region
          %233 = dma.done [#allocation6], 64
        $region44: #{tpu_custom_call.1} parent=39 // pred_fallthru
          _
        %p234 = scmp.lt.s32.totalorder %s24, 1
        %s235 = scalar_select %p234, %s24, 1
        %s236 = smul.addr %s235, 2
        %s237 = smul.addr %s236, 4
        %s238 = scalar_lea.vmem %s0, %s237
        %p239 = pneg %p53
        %p240 = pneg %p50
        %p241 = scmp.lt.s32.totalorder %s24, 1
        %s242 = scalar_select %p241, %s24, 1
        %s243 = smul.addr %s242, 4
        %s244 = scalar_lea.vmem %s1, %s243
        %p245 = pneg %p79
        %p246 = pneg %p76
        %p247 = pneg %p100
        %p248 = pneg %p97
        %p249 = pneg %p121
        %p250 = pneg %p118
        %p251 = pneg %p142
        %p252 = pneg %p139
        %p253 = pneg %p170
        %p254 = pneg %p167
        %s255 = sand.u32 %s157, 1
        %s256 = scalar_lea.sflag [#allocation7], %s255
        %s257 = sand.u32 %s157, 1
        %s258 = smul.addr %s257, 8
        %s259 = scalar_lea.vmem [#allocation8], %s258
        %p260 = scmp.lt.s32.totalorder %s24, 1
        %s261 = scalar_select %p260, %s24, 1
        %s262 = smul.addr %s261, 2
        %s263 = smul.addr %s262, 4
        %s264 = scalar_lea.vmem %s0, %s263
        %p265 = scmp.lt.s32.totalorder %s24, 1
        %s266 = scalar_select %p265, %s24, 1
        %s267 = smul.addr %s266, 4
        %s268 = scalar_lea.vmem %s1, %s267
        %s269 = smul.u32 2, %s25
        %v271 = vlaneseq
        %v272 = vshrl.u32 %v271, 7
        %v273 = vcvt.s32.f32 %v272
        %p274 = scmp.eq.s32.totalorder %s25, 0
        // Predicated region
        $region45: #{tpu_custom_call.1} parent=39 // pred_check
          %p275 = pneg %p274
        $region46: #{tpu_custom_call.1} parent=39 // pred_check_branch
          %277 = sbr.rel (%p275) target = $region48
        $region47: #{tpu_custom_call.1} parent=39 // pred_region
          %v278 = vld [vmem:[%s264] sm:$0xff]
          %v279 = vld [vmem:[%s268] sm:$0xf]
          %v280 = vpack.c.bf16 %v279, %v279
          %vm281 = vcmask 517120
          %282 = vst.msk [vmem:[#allocation4] sm:$0x3] %vm281, %v280
          %v283 = vld [vmem:[%s2] sm:$0xff]
          %285 = vst [vmem:[#allocation1] ss:$2 sm:$0xff] %v278
          %v286 = vld.sshfl [vmem:[#allocation1] sm:$0xff pattern:$0x75316420]
          %v287 = vld.sshfl [vmem:[#allocation1 + $0x8] sm:$0xff pattern:$0x75316420]
          %vm288 = vcmask 31744
          %v290 = vsel %vm288, %v283, 0
          %vm292 = vcmask 1043456
          %v293 = vsel %vm292, %v286, 0
          %v295 = vsel %vm292, %v287, 0
          %297 = vmatpush.msra.mxu0 0.0
          %298 = vmatpush.msra.mxu0 0.0
          %299 = vmatpush.msra.mxu0 0.0
          %300 = vmatpush.msra.mxu0 0.0
          %301 = vmatpush.msra.mxu0 0.0
          %302 = vmatpush.msra.mxu0 0.0
          %303 = vmatpush.msra.mxu0 0.0
          %304 = vmatpush.msra.mxu0 0.0
          %305 = vmatpush.msra.mxu0 0.0
          %306 = vmatpush.msra.mxu0 0.0
          %307 = vmatpush.msra.mxu0 0.0
          %308 = vmatpush.msra.mxu0 0.0
          %309 = vmatpush.msra.mxu0 0.0
          %310 = vmatpush.msra.mxu0 0.0
          %311 = vmatpush.msra.mxu0 0.0
          %312 = vmatpush.msra.mxu0 %v293
          %313 = vmatmul.f32.gmra.mxu0 %v290
          %v314 = vpop.f32.mrf.mxu0
          %v315 = vadd.f32 0.0, %v314
          %316 = vdwg.mxu0
          %317 = vmatpush.msra.mxu0 0.0
          %318 = vmatpush.msra.mxu0 0.0
          %319 = vmatpush.msra.mxu0 0.0
          %320 = vmatpush.msra.mxu0 0.0
          %321 = vmatpush.msra.mxu0 0.0
          %322 = vmatpush.msra.mxu0 0.0
          %323 = vmatpush.msra.mxu0 0.0
          %324 = vmatpush.msra.mxu0 0.0
          %325 = vmatpush.msra.mxu0 0.0
          %326 = vmatpush.msra.mxu0 0.0
          %327 = vmatpush.msra.mxu0 0.0
          %328 = vmatpush.msra.mxu0 0.0
          %329 = vmatpush.msra.mxu0 0.0
          %330 = vmatpush.msra.mxu0 0.0
          %331 = vmatpush.msra.mxu0 0.0
          %332 = vmatpush.msra.mxu0 %v295
          %333 = vmatmul.f32.gmra.mxu0 %v290
          %v334 = vpop.f32.mrf.mxu0
          %v335 = vadd.f32 0.0, %v334
          %336 = vdwg.mxu0
          %v337 = vld [vmem:[%s3] sm:$0xff]
          %v339 = vsel %vm288, %v337, 0
          %v342 = vsel %vm292, %v279, 0
          %344 = vmatpush.msra.mxu0 0.0
          %345 = vmatpush.msra.mxu0 0.0
          %346 = vmatpush.msra.mxu0 0.0
          %347 = vmatpush.msra.mxu0 0.0
          %348 = vmatpush.msra.mxu0 0.0
          %349 = vmatpush.msra.mxu0 0.0
          %350 = vmatpush.msra.mxu0 0.0
          %351 = vmatpush.msra.mxu0 0.0
          %352 = vmatpush.msra.mxu0 0.0
          %353 = vmatpush.msra.mxu0 0.0
          %354 = vmatpush.msra.mxu0 0.0
          %355 = vmatpush.msra.mxu0 0.0
          %356 = vmatpush.msra.mxu0 0.0
          %357 = vmatpush.msra.mxu0 0.0
          %358 = vmatpush.msra.mxu0 0.0
          %359 = vmatpush.msra.mxu0 %v342
          %360 = vmatmul.f32.gmra.mxu0 %v339
          %v361 = vpop.f32.mrf.mxu0
          %v362 = vadd.f32 0.0, %v361
          %363 = vdwg.mxu0
          %v364 = vpack.c.bf16 %v362, %v362
          %v365 = vlaneseq
          %v366 = vand.u32 %v365, 127
          %v367 = vadd.s32 %v366, 128
          %v368 = vcvt.s32.f32 %v366
          %v369 = vcvt.s32.f32 %v367
          %v370 = vrcp.pop 16.0
          %v371 = vmul.f32 16.0, %v370
          %v372 = vsub.f32 1.0, %v371
          %v373 = vmul.f32 %v370, %v372
          %v374 = vadd.f32 %v370, %v373
          %vm375 = vweird.f32 %v370
          %v376 = vsel %vm375, %v370, %v374
          %v377 = vmul.f32 %v368, %v376
          %v378 = vmul.f32 %v369, %v376
          %v379 = vfloor.f32 %v377
          %v380 = vfloor.f32 %v378
          %v381 = vmul.f32 %v379, 16.0
          %v382 = vmul.f32 %v380, 16.0
          %v383 = vsub.f32 %v368, %v381
          %v384 = vsub.f32 %v369, %v382
          %v385 = vstv 0
          %v386 = vadd.s32 %v385, %v366
          %v387 = vadd.s32 %v385, %v367
          %v388 = vcvt.s32.f32 %v386
          %v389 = vcvt.s32.f32 %v387
          %v390 = vmul.f32 %v388, %v376
          %v391 = vmul.f32 %v389, %v376
          %v392 = vfloor.f32 %v390
          %v393 = vfloor.f32 %v391
          %v394 = vmul.f32 %v392, 16.0
          %v395 = vmul.f32 %v393, 16.0
          %v396 = vsub.f32 %v388, %v394
          %v397 = vsub.f32 %v389, %v395
          %v398 = vadd.f32 %v392, 0.5
          %v399 = vadd.f32 %v393, 0.5
          %v400 = vmul.f32 %v398, 0.5
          %v401 = vmul.f32 %v399, 0.5
          %v402 = vsub.f32 %v400, 0.5
          %v403 = vsub.f32 %v401, 0.5
          %v404 = vmax.f32 %v402, 0.0
          %v405 = vmax.f32 %v403, 0.0
          %v406 = vmin.f32 %v404, 7.0
          %v407 = vmin.f32 %v405, 7.0
          %v408 = vadd.f32 %v396, 0.5
          %v409 = vadd.f32 %v397, 0.5
          %v410 = vmul.f32 %v408, 0.5
          %v411 = vmul.f32 %v409, 0.5
          %v412 = vsub.f32 %v410, 0.5
          %v413 = vsub.f32 %v411, 0.5
          %v414 = vmax.f32 %v412, 0.0
          %v415 = vmax.f32 %v413, 0.0
          %v416 = vmin.f32 %v414, 7.0
          %v417 = vmin.f32 %v415, 7.0
          %v418 = vsub.f32 %v406, %v273
          %v419 = vsub.f32 %v407, %v273
          %v420 = vand.u32 2147483647, %v418
          %v421 = vand.u32 2147483647, %v419
          %v422 = vsub.f32 1.0, %v420
          %v423 = vsub.f32 1.0, %v421
          %v424 = vmax.f32 %v422, 0.0
          %v425 = vmax.f32 %v423, 0.0
          %v426 = vsub.f32 %v416, %v273
          %v427 = vsub.f32 %v417, %v273
          %v428 = vand.u32 2147483647, %v426
          %v429 = vand.u32 2147483647, %v427
          %v430 = vsub.f32 1.0, %v428
          %v431 = vsub.f32 1.0, %v429
          %v432 = vmax.f32 %v430, 0.0
          %v433 = vmax.f32 %v431, 0.0
          %v436 = vrot.slane %v425, 7
          %vm437 = vcmask 1040384
          %v438 = vsel %vm437, %v424, %v436
          %vm439 = vcmask 1041409
          %v440 = vsel %vm439, %v424, %v436
          %v441 = vrot.slane %v440, 1
          %vm442 = vcmask 1042434
          %v443 = vsel %vm442, %v424, %v436
          %v444 = vrot.slane %v443, 2
          %vm445 = vcmask 1043459
          %v446 = vsel %vm445, %v424, %v436
          %v447 = vrot.slane %v446, 3
          %vm448 = vcmask 1044484
          %v449 = vsel %vm448, %v424, %v436
          %v450 = vrot.slane %v449, 4
          %vm451 = vcmask 1045509
          %v452 = vsel %vm451, %v424, %v436
          %v453 = vrot.slane %v452, 5
          %vm454 = vcmask 1046534
          %v455 = vsel %vm454, %v424, %v436
          %v456 = vrot.slane %v455, 6
          %vm457 = vcmask 1046528
          %v458 = vsel %vm457, %v436, %v424
          %v459 = vrot.slane %v458, 7
          %v460 = vperm.slane %v438, 0
          %v461 = vperm.slane %v438, 1
          %v462 = vperm.slane %v441, 0
          %v463 = vperm.slane %v441, 1
          %v464 = vperm.slane %v444, 0
          %v465 = vperm.slane %v444, 1
          %v466 = vperm.slane %v447, 0
          %v467 = vperm.slane %v447, 1
          %v468 = vperm.slane %v450, 0
          %v469 = vperm.slane %v450, 1
          %v470 = vperm.slane %v453, 0
          %v471 = vperm.slane %v453, 1
          %v472 = vperm.slane %v456, 0
          %v473 = vperm.slane %v456, 1
          %v474 = vperm.slane %v459, 0
          %v475 = vperm.slane %v459, 1
          %v492 = vmul.f32 %v460, %v432
          %v493 = vmul.f32 %v461, %v433
          %v494 = vmul.f32 %v462, %v432
          %v495 = vmul.f32 %v463, %v433
          %v496 = vmul.f32 %v464, %v432
          %v497 = vmul.f32 %v465, %v433
          %v498 = vmul.f32 %v466, %v432
          %v499 = vmul.f32 %v467, %v433
          %v500 = vmul.f32 %v468, %v432
          %v501 = vmul.f32 %v469, %v433
          %v502 = vmul.f32 %v470, %v432
          %v503 = vmul.f32 %v471, %v433
          %v504 = vmul.f32 %v472, %v432
          %v505 = vmul.f32 %v473, %v433
          %v506 = vmul.f32 %v474, %v432
          %v507 = vmul.f32 %v475, %v433
          %v508 = vpack.c.bf16 %v494, %v492
          %v509 = vpack.c.bf16 %v495, %v493
          %v510 = vpack.c.bf16 %v498, %v496
          %v511 = vpack.c.bf16 %v499, %v497
          %v512 = vpack.c.bf16 %v502, %v500
          %v513 = vpack.c.bf16 %v503, %v501
          %v514 = vpack.c.bf16 %v506, %v504
          %v515 = vpack.c.bf16 %v507, %v505
          %vm516 = vcmask 523264
          %v518 = vsel %vm516, %v364, 0
          %520 = vmatpush.bf16.msra.mxu0 0
          %521 = vmatpush.bf16.msra.mxu0 0
          %522 = vmatpush.bf16.msra.mxu0 0
          %523 = vmatpush.bf16.msra.mxu0 0
          %524 = vmatpush.bf16.msra.mxu0 %v514
          %525 = vmatpush.bf16.msra.mxu0 %v512
          %526 = vmatpush.bf16.msra.mxu0 %v510
          %527 = vmatpush.bf16.msra.mxu0 %v508
          %528 = vmatmul.bf16.gmra.mxu0 %v518
          %v529 = vpop.f32.mrf.mxu0
          %v530 = vadd.f32 0.0, %v529
          %v531 = vpop.f32.mrf.mxu0
          %532 = vdwg.mxu0
          %533 = vmatpush.bf16.msra.mxu0 0
          %534 = vmatpush.bf16.msra.mxu0 0
          %535 = vmatpush.bf16.msra.mxu0 0
          %536 = vmatpush.bf16.msra.mxu0 0
          %537 = vmatpush.bf16.msra.mxu0 %v515
          %538 = vmatpush.bf16.msra.mxu0 %v513
          %539 = vmatpush.bf16.msra.mxu0 %v511
          %540 = vmatpush.bf16.msra.mxu0 %v509
          %541 = vmatmul.bf16.gmra.mxu0 %v518
          %v542 = vpop.f32.mrf.mxu0
          %v543 = vadd.f32 0.0, %v542
          %v544 = vpop.f32.mrf.mxu0
          %545 = vdwg.mxu0
          %546 = vst [vmem:[#allocation3] sm:$0xff] %v530
          %547 = vst [vmem:[#allocation3 + $0x8] sm:$0xff] %v543
          %v548 = vld [vmem:[#allocation3] sm:$0xff]
          %v549 = vld [vmem:[#allocation3 + $0x8] sm:$0xff]
          %vm550 = vcmp.ge.f32.partialorder %v383, 1.0
          %vm551 = vcmp.ge.f32.partialorder %v384, 1.0
          %v552 = vsel %vm550, 1, 0
          %v553 = vsel %vm551, 1, 0
          %v554 = vcvt.s32.f32 %v552
          %v555 = vcvt.s32.f32 %v553
          %vm556 = vcmp.le.f32.partialorder %v383, 14.0
          %vm557 = vcmp.le.f32.partialorder %v384, 14.0
          %v558 = vsel %vm556, 1, 0
          %v559 = vsel %vm557, 1, 0
          %v560 = vcvt.s32.f32 %v558
          %v561 = vcvt.s32.f32 %v559
          %vm562 = vcmp.ge.f32.partialorder %v379, 1.0
          %vm563 = vcmp.ge.f32.partialorder %v380, 1.0
          %v564 = vsel %vm562, 1, 0
          %v565 = vsel %vm563, 1, 0
          %v566 = vcvt.s32.f32 %v564
          %v567 = vcvt.s32.f32 %v565
          %vm568 = vcmp.le.f32.partialorder %v379, 14.0
          %vm569 = vcmp.le.f32.partialorder %v380, 14.0
          %v570 = vsel %vm568, 1, 0
          %v571 = vsel %vm569, 1, 0
          %v572 = vcvt.s32.f32 %v570
          %v573 = vcvt.s32.f32 %v571
          %574 = vrot.lane.b32.xlu0 %v548, 17
          %v575 = vpop.permute.xlu0 %574
          %576 = vrot.lane.b32.xlu0 %v315, 17
          %v577 = vpop.permute.xlu0 %576
          %578 = vrot.lane.b32.xlu0 %v549, 17
          %v579 = vpop.permute.xlu0 %578
          %580 = vrot.lane.b32.xlu0 %v335, 17
          %v581 = vpop.permute.xlu0 %580
          %vm582 = vcmp.lt.s32.totalorder %v366, 17
          %v583 = vsel %vm582, %v575, %v579
          %v584 = vsel %vm582, %v577, %v581
          %v585 = vsel %vm582, %v579, %v575
          %v586 = vsel %vm582, %v581, %v577
          %v587 = vmul.f32 %v585, %v554
          %v588 = vmul.f32 %v583, %v555
          %v589 = vmul.f32 %v586, %v554
          %v590 = vmul.f32 %v584, %v555
          %v591 = vmul.f32 %v587, %v566
          %v592 = vmul.f32 %v588, %v567
          %v593 = vmul.f32 %v589, %v566
          %v594 = vmul.f32 %v590, %v567
          %595 = vrot.lane.b32.xlu0 %v548, 16
          %v596 = vpop.permute.xlu0 %595
          %597 = vrot.lane.b32.xlu0 %v315, 16
          %v598 = vpop.permute.xlu0 %597
          %599 = vrot.lane.b32.xlu0 %v549, 16
          %v600 = vpop.permute.xlu0 %599
          %601 = vrot.lane.b32.xlu0 %v335, 16
          %v602 = vpop.permute.xlu0 %601
          %vm603 = vcmp.lt.s32.totalorder %v366, 16
          %v604 = vsel %vm603, %v596, %v600
          %v605 = vsel %vm603, %v598, %v602
          %v606 = vsel %vm603, %v600, %v596
          %v607 = vsel %vm603, %v602, %v598
          %v608 = vmul.f32 %v606, %v566
          %v609 = vmul.f32 %v604, %v567
          %v610 = vmul.f32 %v607, %v566
          %v611 = vmul.f32 %v605, %v567
          %612 = vrot.lane.b32.xlu0 %v548, 15
          %v613 = vpop.permute.xlu0 %612
          %614 = vrot.lane.b32.xlu0 %v315, 15
          %v615 = vpop.permute.xlu0 %614
          %616 = vrot.lane.b32.xlu0 %v549, 15
          %v617 = vpop.permute.xlu0 %616
          %618 = vrot.lane.b32.xlu0 %v335, 15
          %v619 = vpop.permute.xlu0 %618
          %vm620 = vcmp.lt.s32.totalorder %v366, 15
          %v621 = vsel %vm620, %v613, %v617
          %v622 = vsel %vm620, %v615, %v619
          %v623 = vsel %vm620, %v617, %v613
          %v624 = vsel %vm620, %v619, %v615
          %v625 = vmul.f32 %v623, %v560
          %v626 = vmul.f32 %v621, %v561
          %v627 = vmul.f32 %v624, %v560
          %v628 = vmul.f32 %v622, %v561
          %v629 = vmul.f32 %v625, %v566
          %v630 = vmul.f32 %v626, %v567
          %v631 = vmul.f32 %v627, %v566
          %v632 = vmul.f32 %v628, %v567
          %633 = vrot.lane.b32.xlu0 %v548, 1
          %v634 = vpop.permute.xlu0 %633
          %635 = vrot.lane.b32.xlu0 %v315, 1
          %v636 = vpop.permute.xlu0 %635
          %637 = vrot.lane.b32.xlu0 %v549, 1
          %v638 = vpop.permute.xlu0 %637
          %639 = vrot.lane.b32.xlu0 %v335, 1
          %v640 = vpop.permute.xlu0 %639
          %vm641 = vcmp.lt.s32.totalorder %v366, 1
          %v642 = vsel %vm641, %v634, %v638
          %v643 = vsel %vm641, %v636, %v640
          %v644 = vsel %vm641, %v638, %v634
          %v645 = vsel %vm641, %v640, %v636
          %v646 = vmul.f32 %v644, %v554
          %v647 = vmul.f32 %v642, %v555
          %v648 = vmul.f32 %v645, %v554
          %v649 = vmul.f32 %v643, %v555
          %650 = vrot.lane.b32.xlu0 %v548, 127
          %v651 = vpop.permute.xlu0 %650
          %652 = vrot.lane.b32.xlu0 %v315, 127
          %v653 = vpop.permute.xlu0 %652
          %654 = vrot.lane.b32.xlu0 %v549, 127
          %v655 = vpop.permute.xlu0 %654
          %656 = vrot.lane.b32.xlu0 %v335, 127
          %v657 = vpop.permute.xlu0 %656
          %vm658 = vcmp.lt.s32.totalorder %v366, 127
          %v659 = vsel %vm658, %v651, %v655
          %v660 = vsel %vm658, %v653, %v657
          %v661 = vsel %vm658, %v655, %v651
          %v662 = vsel %vm658, %v657, %v653
          %v663 = vmul.f32 %v659, %v560
          %v664 = vmul.f32 %v661, %v561
          %v665 = vmul.f32 %v660, %v560
          %v666 = vmul.f32 %v662, %v561
          %667 = vrot.lane.b32.xlu0 %v548, 113
          %v668 = vpop.permute.xlu0 %667
          %669 = vrot.lane.b32.xlu0 %v315, 113
          %v670 = vpop.permute.xlu0 %669
          %671 = vrot.lane.b32.xlu0 %v549, 113
          %v672 = vpop.permute.xlu0 %671
          %673 = vrot.lane.b32.xlu0 %v335, 113
          %v674 = vpop.permute.xlu0 %673
          %vm675 = vcmp.lt.s32.totalorder %v366, 113
          %v676 = vsel %vm675, %v668, %v672
          %v677 = vsel %vm675, %v670, %v674
          %v678 = vsel %vm675, %v672, %v668
          %v679 = vsel %vm675, %v674, %v670
          %v680 = vmul.f32 %v676, %v554
          %v681 = vmul.f32 %v678, %v555
          %v682 = vmul.f32 %v677, %v554
          %v683 = vmul.f32 %v679, %v555
          %v684 = vmul.f32 %v680, %v572
          %v685 = vmul.f32 %v681, %v573
          %v686 = vmul.f32 %v682, %v572
          %v687 = vmul.f32 %v683, %v573
          %688 = vrot.lane.b32.xlu0 %v548, 112
          %v689 = vpop.permute.xlu0 %688
          %690 = vrot.lane.b32.xlu0 %v315, 112
          %v691 = vpop.permute.xlu0 %690
          %692 = vrot.lane.b32.xlu0 %v549, 112
          %v693 = vpop.permute.xlu0 %692
          %694 = vrot.lane.b32.xlu0 %v335, 112
          %v695 = vpop.permute.xlu0 %694
          %vm696 = vcmp.lt.s32.totalorder %v366, 112
          %v697 = vsel %vm696, %v689, %v693
          %v698 = vsel %vm696, %v691, %v695
          %v699 = vsel %vm696, %v693, %v689
          %v700 = vsel %vm696, %v695, %v691
          %v701 = vmul.f32 %v697, %v572
          %v702 = vmul.f32 %v699, %v573
          %v703 = vmul.f32 %v698, %v572
          %v704 = vmul.f32 %v700, %v573
          %705 = vrot.lane.b32.xlu0 %v548, 111
          %v706 = vpop.permute.xlu0 %705
          %707 = vrot.lane.b32.xlu0 %v315, 111
          %v708 = vpop.permute.xlu0 %707
          %709 = vrot.lane.b32.xlu0 %v549, 111
          %v710 = vpop.permute.xlu0 %709
          %711 = vrot.lane.b32.xlu0 %v335, 111
          %v712 = vpop.permute.xlu0 %711
          %vm713 = vcmp.lt.s32.totalorder %v366, 111
          %v714 = vsel %vm713, %v706, %v710
          %v715 = vsel %vm713, %v708, %v712
          %v716 = vsel %vm713, %v710, %v706
          %v717 = vsel %vm713, %v712, %v708
          %v718 = vmul.f32 %v714, %v560
          %v719 = vmul.f32 %v716, %v561
          %v720 = vmul.f32 %v715, %v560
          %v721 = vmul.f32 %v717, %v561
          %v722 = vmul.f32 %v718, %v572
          %v723 = vmul.f32 %v719, %v573
          %v724 = vmul.f32 %v720, %v572
          %v725 = vmul.f32 %v721, %v573
          %v726 = vld [vmem:[#allocation5] sm:$0xf]
          %728 = vst [vmem:[#allocation1] ss:$4 sm:$0xff] %v726
          %v729 = vld.sshfl [vmem:[#allocation1] sm:$0xff pattern:$0x73625140]
          %v730 = vld.sshfl [vmem:[#allocation1 + $0x8] sm:$0xff pattern:$0x73625140]
          %vm732 = vcmask 130048
          %v733 = vsel %vm732, %v730, 0
          %735 = vmatpush.msra.mxu0 %v703
          %736 = vmatpush.msra.mxu0 %v701
          %737 = vmatpush.msra.mxu0 %v686
          %738 = vmatpush.msra.mxu0 %v684
          %739 = vmatpush.msra.mxu0 %v665
          %740 = vmatpush.msra.mxu0 %v663
          %741 = vmatpush.msra.mxu0 %v315
          %742 = vmatpush.msra.mxu0 %v548
          %743 = vmatpush.msra.mxu0 %v648
          %744 = vmatpush.msra.mxu0 %v646
          %745 = vmatpush.msra.mxu0 %v631
          %746 = vmatpush.msra.mxu0 %v629
          %747 = vmatpush.msra.mxu0 %v610
          %748 = vmatpush.msra.mxu0 %v608
          %749 = vmatpush.msra.mxu0 %v593
          %750 = vmatpush.msra.mxu0 %v591
          %751 = vmatmul.f32.gmra.mxu0 %v729
          %v752 = vpop.f32.mrf.mxu0
          %v753 = vadd.f32 0.0, %v752
          %754 = vdwg.mxu0
          %755 = vmatpush.msra.mxu0 0.0
          %756 = vmatpush.msra.mxu0 0.0
          %757 = vmatpush.msra.mxu0 0.0
          %758 = vmatpush.msra.mxu0 0.0
          %759 = vmatpush.msra.mxu0 0.0
          %760 = vmatpush.msra.mxu0 0.0
          %761 = vmatpush.msra.mxu0 0.0
          %762 = vmatpush.msra.mxu0 0.0
          %763 = vmatpush.msra.mxu0 0.0
          %764 = vmatpush.msra.mxu0 0.0
          %765 = vmatpush.msra.mxu0 0.0
          %766 = vmatpush.msra.mxu0 0.0
          %767 = vmatpush.msra.mxu0 0.0
          %768 = vmatpush.msra.mxu0 0.0
          %769 = vmatpush.msra.mxu0 %v724
          %770 = vmatpush.msra.mxu0 %v722
          %771 = vmatmul.f32.gmra.mxu0 %v733
          %v772 = vpop.f32.mrf.mxu0
          %v773 = vadd.f32 %v753, %v772
          %774 = vdwg.mxu0
          %775 = vmatpush.msra.mxu0 %v704
          %776 = vmatpush.msra.mxu0 %v702
          %777 = vmatpush.msra.mxu0 %v687
          %778 = vmatpush.msra.mxu0 %v685
          %779 = vmatpush.msra.mxu0 %v666
          %780 = vmatpush.msra.mxu0 %v664
          %781 = vmatpush.msra.mxu0 %v335
          %782 = vmatpush.msra.mxu0 %v549
          %783 = vmatpush.msra.mxu0 %v649
          %784 = vmatpush.msra.mxu0 %v647
          %785 = vmatpush.msra.mxu0 %v632
          %786 = vmatpush.msra.mxu0 %v630
          %787 = vmatpush.msra.mxu0 %v611
          %788 = vmatpush.msra.mxu0 %v609
          %789 = vmatpush.msra.mxu0 %v594
          %790 = vmatpush.msra.mxu0 %v592
          %791 = vmatmul.f32.gmra.mxu0 %v729
          %v792 = vpop.f32.mrf.mxu0
          %v793 = vadd.f32 0.0, %v792
          %794 = vdwg.mxu0
          %795 = vmatpush.msra.mxu0 0.0
          %796 = vmatpush.msra.mxu0 0.0
          %797 = vmatpush.msra.mxu0 0.0
          %798 = vmatpush.msra.mxu0 0.0
          %799 = vmatpush.msra.mxu0 0.0
          %800 = vmatpush.msra.mxu0 0.0
          %801 = vmatpush.msra.mxu0 0.0
          %802 = vmatpush.msra.mxu0 0.0
          %803 = vmatpush.msra.mxu0 0.0
          %804 = vmatpush.msra.mxu0 0.0
          %805 = vmatpush.msra.mxu0 0.0
          %806 = vmatpush.msra.mxu0 0.0
          %807 = vmatpush.msra.mxu0 0.0
          %808 = vmatpush.msra.mxu0 0.0
          %809 = vmatpush.msra.mxu0 %v725
          %810 = vmatpush.msra.mxu0 %v723
          %811 = vmatmul.f32.gmra.mxu0 %v733
          %v812 = vpop.f32.mrf.mxu0
          %v813 = vadd.f32 %v793, %v812
          %814 = vdwg.mxu0
          %v815 = vmul.f32 %v383, 2.0
          %v816 = vmul.f32 %v384, 2.0
          %v817 = vrcp.pop 15.0
          %v818 = vmul.f32 15.0, %v817
          %v819 = vsub.f32 1.0, %v818
          %v820 = vmul.f32 %v817, %v819
          %v821 = vadd.f32 %v817, %v820
          %vm822 = vweird.f32 %v817
          %v823 = vsel %vm822, %v817, %v821
          %v824 = vmul.f32 %v815, %v823
          %v825 = vmul.f32 %v816, %v823
          %v826 = vadd.f32 %v824, -1.0
          %v827 = vadd.f32 %v825, -1.0
          %v828 = vmul.f32 %v379, 2.0
          %v829 = vmul.f32 %v380, 2.0
          %v830 = vmul.f32 %v828, %v823
          %v831 = vmul.f32 %v829, %v823
          %v832 = vadd.f32 %v830, -1.0
          %v833 = vadd.f32 %v831, -1.0
          %v834 = vmul.f32 %v773, %v376
          %v835 = vmul.f32 %v813, %v376
          %v836 = vadd.f32 %v826, %v834
          %v837 = vadd.f32 %v827, %v835
          %v838 = vadd.f32 %v836, 1.0
          %v839 = vadd.f32 %v837, 1.0
          %v840 = vmul.f32 %v838, 3.5
          %v841 = vmul.f32 %v839, 3.5
          %v842 = vadd.f32 %v832, %v834
          %v843 = vadd.f32 %v833, %v835
          %v844 = vadd.f32 %v842, 1.0
          %v845 = vadd.f32 %v843, 1.0
          %v846 = vmul.f32 %v844, 3.5
          %v847 = vmul.f32 %v845, 3.5
          %v848 = vsel %vm437, %v840, %v846
          %v849 = vsel %vm437, %v841, %v847
          %v852 = vrot.slane %v849, 6
          %vm853 = vcmask 1041408
          %v854 = vsel %vm853, %v848, %v852
          %856 = vst [vmem:[#allocation2] sm:$0xf] %v854
        $region48: #{tpu_custom_call.1} parent=39 // pred_fallthru
          _
        %s857 = smul.u32 %s25, 256
        %s858 = sshra.s32 %s857, 7
        %s859 = sand.u32 %s857, 127
        %s860 = smul.addr %s858, 2
        %s861 = scalar_lea.vmem [#allocation2], %s860
        %v862 = vld [vmem:[%s861] ss:$2 sm:$0x3]
        %s863 = scalar_lea.vmem %s861, 1 [#allocation2]
        %v864 = vld [vmem:[%s863] ss:$2 sm:$0x3]
        %v866 = vperm.slane %v862, 0
        %v867 = vperm.slane %v862, 1
        %v870 = vsub.f32 %v866, %v273
        %v871 = vsub.f32 %v867, %v273
        %v872 = vand.u32 2147483647, %v870
        %v873 = vand.u32 2147483647, %v871
        %v874 = vsub.f32 1.0, %v872
        %v875 = vsub.f32 1.0, %v873
        %v876 = vmax.f32 %v874, 0.0
        %v877 = vmax.f32 %v875, 0.0
        %v879 = vperm.slane %v864, 0
        %v880 = vperm.slane %v864, 1
        %v883 = vsub.f32 %v879, %v273
        %v884 = vsub.f32 %v880, %v273
        %v885 = vand.u32 2147483647, %v883
        %v886 = vand.u32 2147483647, %v884
        %v887 = vsub.f32 1.0, %v885
        %v888 = vsub.f32 1.0, %v886
        %v889 = vmax.f32 %v887, 0.0
        %v890 = vmax.f32 %v888, 0.0
        %v893 = vrot.slane %v890, 7
        %vm894 = vcmask 1040384
        %v895 = vsel %vm894, %v889, %v893
        %vm896 = vcmask 1041409
        %v897 = vsel %vm896, %v889, %v893
        %v898 = vrot.slane %v897, 1
        %vm899 = vcmask 1042434
        %v900 = vsel %vm899, %v889, %v893
        %v901 = vrot.slane %v900, 2
        %vm902 = vcmask 1043459
        %v903 = vsel %vm902, %v889, %v893
        %v904 = vrot.slane %v903, 3
        %vm905 = vcmask 1044484
        %v906 = vsel %vm905, %v889, %v893
        %v907 = vrot.slane %v906, 4
        %vm908 = vcmask 1045509
        %v909 = vsel %vm908, %v889, %v893
        %v910 = vrot.slane %v909, 5
        %vm911 = vcmask 1046534
        %v912 = vsel %vm911, %v889, %v893
        %v913 = vrot.slane %v912, 6
        %vm914 = vcmask 1046528
        %v915 = vsel %vm914, %v893, %v889
        %v916 = vrot.slane %v915, 7
        %v917 = vperm.slane %v895, 0
        %v918 = vperm.slane %v895, 1
        %v919 = vperm.slane %v898, 0
        %v920 = vperm.slane %v898, 1
        %v921 = vperm.slane %v901, 0
        %v922 = vperm.slane %v901, 1
        %v923 = vperm.slane %v904, 0
        %v924 = vperm.slane %v904, 1
        %v925 = vperm.slane %v907, 0
        %v926 = vperm.slane %v907, 1
        %v927 = vperm.slane %v910, 0
        %v928 = vperm.slane %v910, 1
        %v929 = vperm.slane %v913, 0
        %v930 = vperm.slane %v913, 1
        %v931 = vperm.slane %v916, 0
        %v932 = vperm.slane %v916, 1
        %v949 = vmul.f32 %v917, %v876
        %v950 = vmul.f32 %v918, %v877
        %v951 = vmul.f32 %v919, %v876
        %v952 = vmul.f32 %v920, %v877
        %v953 = vmul.f32 %v921, %v876
        %v954 = vmul.f32 %v922, %v877
        %v955 = vmul.f32 %v923, %v876
        %v956 = vmul.f32 %v924, %v877
        %v957 = vmul.f32 %v925, %v876
        %v958 = vmul.f32 %v926, %v877
        %v959 = vmul.f32 %v927, %v876
        %v960 = vmul.f32 %v928, %v877
        %v961 = vmul.f32 %v929, %v876
        %v962 = vmul.f32 %v930, %v877
        %v963 = vmul.f32 %v931, %v876
        %v964 = vmul.f32 %v932, %v877
        %v965 = vpack.c.bf16 %v951, %v949
        %v966 = vpack.c.bf16 %v952, %v950
        %v967 = vpack.c.bf16 %v955, %v953
        %v968 = vpack.c.bf16 %v956, %v954
        %v969 = vpack.c.bf16 %v959, %v957
        %v970 = vpack.c.bf16 %v960, %v958
        %v971 = vpack.c.bf16 %v963, %v961
        %v972 = vpack.c.bf16 %v964, %v962
        %v973 = vld [vmem:[#allocation4] sm:$0x3]
        %vm974 = vcmask 523264
        %v976 = vsel %vm974, %v973, 0
        %978 = vmatpush.bf16.msra.mxu0 0
        %979 = vmatpush.bf16.msra.mxu0 0
        %980 = vmatpush.bf16.msra.mxu0 0
        %981 = vmatpush.bf16.msra.mxu0 0
        %982 = vmatpush.bf16.msra.mxu0 %v971
        %983 = vmatpush.bf16.msra.mxu0 %v969
        %984 = vmatpush.bf16.msra.mxu0 %v967
        %985 = vmatpush.bf16.msra.mxu0 %v965
        %986 = vmatmul.bf16.gmra.mxu0 %v976
        %v987 = vpop.f32.mrf.mxu0
        %v988 = vadd.f32 0.0, %v987
        %v989 = vpop.f32.mrf.mxu0
        %990 = vdwg.mxu0
        %991 = vmatpush.bf16.msra.mxu0 0
        %992 = vmatpush.bf16.msra.mxu0 0
        %993 = vmatpush.bf16.msra.mxu0 0
        %994 = vmatpush.bf16.msra.mxu0 0
        %995 = vmatpush.bf16.msra.mxu0 %v972
        %996 = vmatpush.bf16.msra.mxu0 %v970
        %997 = vmatpush.bf16.msra.mxu0 %v968
        %998 = vmatpush.bf16.msra.mxu0 %v966
        %999 = vmatmul.bf16.gmra.mxu0 %v976
        %v1000 = vpop.f32.mrf.mxu0
        %v1001 = vadd.f32 0.0, %v1000
        %v1002 = vpop.f32.mrf.mxu0
        %1003 = vdwg.mxu0
        %v1006 = vrot.slane %v1001, 4
        %vm1007 = vcmask 1043456
        %v1008 = vsel %vm1007, %v988, %v1006
        %1010 = vst [vmem:[%s259] sm:$0xff] %v1008
        %s1011 = sand.u32 %s157, 1
        %s1012 = scalar_lea.sflag [#allocation7], %s1011
        %s1013 = sand.u32 %s157, 1
        %s1014 = smul.addr %s1013, 8
        %s1015 = scalar_lea.vmem [#allocation8], %s1014
        // Predicated region
        $region49: #{tpu_custom_call.1} parent=39 // pred_check
          %p1016 = pneg %p167
        $region50: #{tpu_custom_call.1} parent=39 // pred_check_branch
          %1018 = sbr.rel (%p1016) target = $region52
        $region51: #{tpu_custom_call.1} parent=39 // pred_region
          %s1019 = smul.u32 2, %s25
          %1021 = vsyncadd %s1012, 0
          %s1022 = smul.addr %s24, 2
          %s1023 = sadd.s32 %s1019, %s1022
          %s1024 = smul.addr %s1023, 4
          %s1025 = scalar_lea.hbm %s5, %s1024
          %s1027 = sshll.u32 %s1015, 4
          %s1028 = int_to_ptr.vmem [resolvable:$true] %s1027
          %s1029 = sshll.u32 %s1025, 4
          %s1030 = int_to_ptr.hbm [resolvable:$true] %s1029
          %1032 = dma.vmem_to_hbm [thread:$0]  %s1028, 128, %s1030, %s1012
        $region52: #{tpu_custom_call.1} parent=39 // pred_fallthru
          _
      $region40: #{tpu_custom_call.1} parent=5 // pred_fallthru
        _
      %p1033 = scmp.le.s32.totalorder 2, %s15
      // Predicated region
      $region53: #{tpu_custom_call.1} parent=5 // pred_check
        %p1034 = pneg %p1033
      $region54: #{tpu_custom_call.1} parent=5 // pred_check_branch
        %1036 = sbr.rel (%p1034) target = $region56
      $region55: #{tpu_custom_call.1} parent=5 // pred_region
        %s1037 = ssub.s32 %s15, 2
        // Predicated region
        $region57: #{tpu_custom_call.1} parent=55 // pred_check
          %p1038 = pneg %p173
        $region58: #{tpu_custom_call.1} parent=55 // pred_check_branch
          %1040 = sbr.rel (%p1038) target = $region60
        $region59: #{tpu_custom_call.1} parent=55 // pred_region
          %s1041 = sand.u32 %s158, 1
          %s1042 = scalar_lea.sflag [#allocation7], %s1041
          %s1043 = sand.u32 %s158, 1
          %s1044 = smul.addr %s1043, 8
          %s1045 = scalar_lea.vmem [#allocation8], %s1044
          %1047 = dma.done %s1042, 128
        $region60: #{tpu_custom_call.1} parent=55 // pred_fallthru
          _
      $region56: #{tpu_custom_call.1} parent=5 // pred_fallthru
        _
    $region6: #{tpu_custom_call.1} parent=1 // loop_footer
      %s19 = sadd.s32 1, %s15
    $region7: #{tpu_custom_call.1} parent=1 // loop_footer_branch
      %14 = sbr.rel target = $region3
    $region8: #{tpu_custom_call.1} parent=1 // loop_exit
      _
    %1048 = vsyncpa [#allocation6], 1
    %s1049 = scalar_lea.sflag [#allocation6], 1
    %1050 = vsyncpa %s1049, 1
    %1051 = vsyncpa [#allocation7], 1
    %s1052 = scalar_lea.sflag [#allocation7], 1
    %1053 = vsyncpa %s1052, 1

</llo_original>
